<compile_context>
chip_gen: v5e
topology: v5e:2x2
jax: 0.10.0
libtpu: 0.0.40
codegen_flags: <defaults>
</compile_context>

<pallas_src>
import functools

import jax
import jax.numpy as jnp
from jax import lax
from jax.experimental import pallas as pl
from jax.experimental.pallas import tpu as pltpu


def _leaky(v):
    # F.leaky_relu default negative_slope = 0.01
    return jnp.where(v > 0, v, 0.01 * v)


def _round_up(v, m):
    return (v + m - 1) // m * m


# ---------------------------------------------------------------------------
# Stage 1: conv1 -> leaky -> conv2 -> leaky, per batch element, (C, L) layout.
# ---------------------------------------------------------------------------
def _conv_kernel(x_ref, w1_ref, b1_ref, w2_ref, b2_ref, h2_ref):
    # x_ref : (1, Cin, L)  f32   one batch element (grid axis 0 = batch)
    # w1_ref: (C1, 3*Cin)  f32   column = tap*Cin + cin, taps = (l-1, l, l+1)
    # b1_ref: (C1, 1)      f32
    # w2_ref: (C2, 3*C1)   f32
    # b2_ref: (C2, 1)      f32
    # h2_ref: (1, C2, L)   compute dtype (output)
    L = x_ref.shape[2]

    def taps(a):
        # a: (C, L) -> (3C, L) with rows [a[:, l-1]; a[:, l]; a[:, l+1]],
        # zero outside [0, L).  Static-shift jnp.roll + one boundary mask each.
        idx = lax.broadcasted_iota(jnp.int32, a.shape, 1)
        left = jnp.where(idx == 0, 0.0, jnp.roll(a, 1, axis=1))        # a[:, l-1]
        right = jnp.where(idx == L - 1, 0.0, jnp.roll(a, -1, axis=1))  # a[:, l+1]
        return jnp.concatenate([left, a, right], axis=0)

    xb = x_ref[0].astype(jnp.float32)                                  # (Cin, L)
    h1 = _leaky(jnp.dot(w1_ref[...], taps(xb),
                        preferred_element_type=jnp.float32) + b1_ref[...])   # (C1, L)
    h2 = _leaky(jnp.dot(w2_ref[...], taps(h1),
                        preferred_element_type=jnp.float32) + b2_ref[...])   # (C2, L)
    h2_ref[0] = h2.astype(h2_ref.dtype)


# ---------------------------------------------------------------------------
# Stage 2: fc1 K-reduction (channel-block tiles), split across cores on axis 0.
# ---------------------------------------------------------------------------
def _fc1_partial_kernel(h2_ref, wfc1_ref, out_ref, acc_ref):
    # h2_ref  : (ct, B, L)  streamed block of channel-major activations
    # wfc1_ref: (ct, L, H)  streamed fc1 weight K-tile (lane-dense)
    # out_ref : (1, B, H)   this split's partial fc1 pre-activation (f32)
    # acc_ref : (B, H)      f32 accumulator (persists across the k axis)
    k = pl.program_id(1)

    @pl.when(k == 0)
    def _init():
        acc_ref[...] = jnp.zeros_like(acc_ref)

    ct = h2_ref.shape[0]
    part = jnp.zeros(acc_ref.shape, jnp.float32)
    for cc in range(ct):  # static unroll over the channels of this block
        part = part + jnp.dot(h2_ref[cc], wfc1_ref[cc],
                              preferred_element_type=jnp.float32)
    acc_ref[...] += part

    @pl.when(k == pl.num_programs(1) - 1)
    def _finish():
        out_ref[0] = acc_ref[...]


# ---------------------------------------------------------------------------
# One-time parameter packing (hoisted out of the per-call path).
# ---------------------------------------------------------------------------
def pack_cnn_params(w1_t, b1_t, w2_t, b2_t, wfc1_t, bfc1_t, wfc2_t, bfc2_t,
                    *, compute_dtype=jnp.bfloat16):
    """Packs PyTorch-layout parameters for the Pallas kernels.

    PyTorch layouts: w1_t (C1, Cin, 3), b1_t (C1,), w2_t (C2, C1, 3), b2_t (C2,),
    wfc1_t (H, C2*L), bfc1_t (H,), wfc2_t (n_out, H), bfc2_t (n_out,).
    """
    C1, Cin, _ = w1_t.shape
    C2 = w2_t.shape[0]
    H = wfc1_t.shape[0]
    L = wfc1_t.shape[1] // C2
    return dict(
        w1=jnp.transpose(w1_t, (0, 2, 1)).reshape(C1, 3 * Cin).astype(jnp.float32),
        b1=b1_t.reshape(C1, 1).astype(jnp.float32),
        w2=jnp.transpose(w2_t, (0, 2, 1)).reshape(C2, 3 * C1).astype(jnp.float32),
        b2=b2_t.reshape(C2, 1).astype(jnp.float32),
        # torch flattens (B, C2, L) as index c*L + l, so
        #   wfc1[c, l, n] = fc1.weight[n, c*L + l]
        wfc1=jnp.transpose(wfc1_t.reshape(H, C2, L), (1, 2, 0)).astype(compute_dtype),
        bfc1=bfc1_t.astype(jnp.float32),
        wfc2=jnp.transpose(wfc2_t).astype(jnp.float32),        # (H, n_out)
        bfc2=bfc2_t.astype(jnp.float32),
    )


# ---------------------------------------------------------------------------
# Forward pass.
# ---------------------------------------------------------------------------
def cnn_forward(x, params, *, n_split=2, max_fc1_tile_bytes=16 * 1024 * 1024):
    """x: (B, n_input, in_channel) -- exactly what torch's forward receives.
    params: output of pack_cnn_params (packed once at model-init time)."""
    B, L, Cin = x.shape
    w1, b1, w2, b2 = params["w1"], params["b1"], params["w2"], params["b2"]
    wfc1, bfc1, wfc2, bfc2 = params["wfc1"], params["bfc1"], params["wfc2"], params["bfc2"]
    C1 = w1.shape[0]
    C2, Lw, H = wfc1.shape
    n_out = wfc2.shape[1]
    assert Lw == L and w2.shape[0] == C2
    compute_dtype = wfc1.dtype

    # ---- stage 1: fused convs (tiny; <2% of total bytes/flops) -------------
    x_cl = jnp.transpose(x, (0, 2, 1)).astype(jnp.float32)              # (B, Cin, L)
    h2 = pl.pallas_call(
        _conv_kernel,
        out_shape=jax.ShapeDtypeStruct((B, C2, L), compute_dtype),
        grid=(B,),
        in_specs=[
            pl.BlockSpec((1, Cin, L), lambda b: (b, 0, 0)),
            pl.BlockSpec((C1, 3 * Cin), lambda b: (0, 0)),
            pl.BlockSpec((C1, 1), lambda b: (0, 0)),
            pl.BlockSpec((C2, 3 * C1), lambda b: (0, 0)),
            pl.BlockSpec((C2, 1), lambda b: (0, 0)),
        ],
        out_specs=pl.BlockSpec((1, C2, L), lambda b: (b, 0, 0)),
        compiler_params=pltpu.CompilerParams(dimension_semantics=("parallel",)),
    )(x_cl, w1, b1, w2, b2)

    # TODO(synk): emit h2 channel-major directly from stage 1 to drop this
    # small XLA transpose (~2 MB round trip at the real n_input).
    h2_cm = jnp.transpose(h2, (1, 0, 2))                                 # (C2, B, L)

    # ---- stage-2 tiling ------------------------------------------------------
    if C2 % n_split != 0:
        n_split = 1
    itm = jnp.dtype(compute_dtype).itemsize
    per_chan_w = _round_up(L, 8) * _round_up(H, 128) * itm               # padded bytes
    max_ct = C2 // n_split
    ct = 1
    while (ct * 2 <= max_ct and max_ct % (ct * 2) == 0
           and (ct * 2) * per_chan_w <= max_fc1_tile_bytes):
        ct *= 2
    k_steps = max_ct // ct

    w_tile = ct * per_chan_w
    h_tile = ct * _round_up(B, 8) * _round_up(L, 128) * itm
    out_blk = _round_up(B, 8) * _round_up(H, 128) * 4
    vmem_limit = int(min(2 * (w_tile + h_tile) + 3 * out_blk + (8 << 20), 100 << 20))

    partials = pl.pallas_call(
        _fc1_partial_kernel,
        out_shape=jax.ShapeDtypeStruct((n_split, B, H), jnp.float32),
        grid=(n_split, k_steps),
        in_specs=[
            pl.BlockSpec((ct, B, L), lambda n, k: (n * k_steps + k, 0, 0)),
            pl.BlockSpec((ct, L, H), lambda n, k: (n * k_steps + k, 0, 0)),
        ],
        out_specs=pl.BlockSpec((1, B, H), lambda n, k: (n, 0, 0)),
        scratch_shapes=[pltpu.VMEM((B, H), jnp.float32)],
        compiler_params=pltpu.CompilerParams(
            dimension_semantics=("parallel", "arbitrary"),
            vmem_limit_bytes=vmem_limit,
        ),
    )(h2_cm, wfc1)

    # ---- tiny epilogue (one small XLA fusion): sum partials, bias, leaky, fc2
    z1 = _leaky(jnp.sum(partials, axis=0) + bfc1[None, :])               # (B, H)
    return jnp.dot(z1, wfc2, preferred_element_type=jnp.float32) + bfc2[None, :]


# ---------------------------------------------------------------------------
# Pure-JAX replica of the PyTorch forward (for the correctness check).
# ---------------------------------------------------------------------------
def torch_reference(x, w1_t, b1_t, w2_t, b2_t, wfc1_t, bfc1_t, wfc2_t, bfc2_t):
    hp = lax.Precision.HIGHEST
    xt = jnp.transpose(x, (0, 2, 1))              # (B, Cin, L)

    def conv(a, w, b):
        o = lax.conv_general_dilated(
            a, w, window_strides=(1,), padding=((1, 1),),
            dimension_numbers=('NCH', 'OIH', 'NCH'), precision=hp)
        return o + b[None, :, None]

    h1 = _leaky(conv(xt, w1_t, b1_t))             # (B, 32, L)
    h2 = _leaky(conv(h1, w2_t, b2_t))             # (B, 64, L)
    flat = h2.reshape(h2.shape[0], -1)            # c*L + l (torch .view order)
    z1 = _leaky(jnp.dot(flat, wfc1_t.T, precision=hp) + bfc1_t)
    return jnp.dot(z1, wfc2_t.T, precision=hp) + bfc2_t


if __name__ == "__main__":
    # small n_input=256 stand-in for the real 7514 (lane-friendly toy size)
    B, L, Cin, n_output = 2, 256, 1, 4
    key = jax.random.PRNGKey(0)
    keys = jax.random.split(key, 9)

    # input: the tensor torch's forward receives, i.e. (B, n_input, in_channel)
    x = jax.random.normal(keys[0], (B, L, Cin), jnp.float32)

    # parameters in PyTorch layout
    w1_t = jax.random.normal(keys[1], (32, Cin, 3), jnp.float32) * 0.1      # conv1.weight
    b1_t = jax.random.normal(keys[2], (32,), jnp.float32) * 0.1             # conv1.bias
    w2_t = jax.random.normal(keys[3], (64, 32, 3), jnp.float32) * 0.1       # conv2.weight
    b2_t = jax.random.normal(keys[4], (64,), jnp.float32) * 0.1             # conv2.bias
    wfc1_t = jax.random.normal(keys[5], (128, 64 * L), jnp.float32) * 0.02  # fc1.weight
    bfc1_t = jax.random.normal(keys[6], (128,), jnp.float32) * 0.1          # fc1.bias
    wfc2_t = jax.random.normal(keys[7], (n_output, 128), jnp.float32) * 0.1 # fc2.weight
    bfc2_t = jax.random.normal(keys[8], (n_output,), jnp.float32) * 0.1     # fc2.bias

    # One-time parameter packing (including the big wfc1 relayout + bf16 cast),
    # hoisted out of the per-forward path.
    params = pack_cnn_params(w1_t, b1_t, w2_t, b2_t, wfc1_t, bfc1_t, wfc2_t, bfc2_t,
                             compute_dtype=jnp.bfloat16)
    params = jax.tree_util.tree_map(jax.block_until_ready, params)

    # Small max_fc1_tile_bytes so the toy shape still exercises a multi-step
    # K-reduction (ct=4 -> 8 steps per split); at the real n_input=7514 the
    # 16 MB default gives ct=8 (4 steps per core on v7x after the 2-way split).
    fwd = jax.jit(functools.partial(cnn_forward, n_split=2,
                                    max_fc1_tile_bytes=256 * 1024))
    out = jax.block_until_ready(fwd(x, params))

    ref = torch_reference(x, w1_t, b1_t, w2_t, b2_t, wfc1_t, bfc1_t, wfc2_t, bfc2_t)
    assert out.shape == (B, n_output), out.shape
    max_err = float(jnp.max(jnp.abs(out - ref)))
    assert jnp.allclose(out, ref, rtol=3e-2, atol=3e-2), (max_err, out, ref)

    print("KERNEL_OK")
</pallas_src>

<mosaic_0001>
module attributes {stable_mosaic.version = 11 : i64} {
  func.func @_fc1_partial_kernel(%arg0: i32, %arg1: i32, %arg2: memref<4x2x256xbf16, #tpu.memory_space<vmem>>, %arg3: memref<4x256x128xbf16, #tpu.memory_space<vmem>>, %arg4: memref<1x2x128xf32, #tpu.memory_space<vmem>>, %arg5: memref<2x128xf32, #tpu.memory_space<vmem>>) attributes {dimension_semantics = [#tpu.dimension_semantics<parallel>, #tpu.dimension_semantics<arbitrary>], iteration_bounds = array<i64: 2, 8>, scalar_prefetch = 0 : i64, scratch_operands = 1 : i64, tpu.core_type = #tpu.core_type<tc>, window_params = [{transform_indices = @transform_0, window_bounds = array<i64: 4, 2, 256>}, {transform_indices = @transform_1, window_bounds = array<i64: 4, 256, 128>}, {transform_indices = @transform_2, window_bounds = array<i64: 1, 2, 128>}]} {
    %c0_i32 = arith.constant 0 : i32
    %0 = arith.cmpi eq, %arg1, %c0_i32 : i32
    %1 = arith.extui %0 : i1 to i32
    %c0_i32_0 = arith.constant 0 : i32
    %2 = arith.cmpi ne, %1, %c0_i32_0 : i32
    scf.if %2 {
      %cst_30 = arith.constant 0.000000e+00 : f32
      %34 = vector.broadcast %cst_30 : f32 to vector<2x128xf32>
      %c0_31 = arith.constant 0 : index
      %c0_32 = arith.constant 0 : index
      %35 = vector.load %arg5[%c0_31, %c0_32] : memref<2x128xf32, #tpu.memory_space<vmem>>, vector<2x128xf32>
      tpu.vector_store %arg5[%c0_31, %c0_32], %34 {strides = array<i32>} : memref<2x128xf32, #tpu.memory_space<vmem>>, vector<2x128xf32>,
    } else {
    }
    %cst = arith.constant 0.000000e+00 : f32
    %3 = vector.broadcast %cst : f32 to vector<2x128xf32>
    %c0 = arith.constant 0 : index
    %c0_1 = arith.constant 0 : index
    %c0_2 = arith.constant 0 : index
    %4 = vector.load %arg2[%c0, %c0_1, %c0_2] : memref<4x2x256xbf16, #tpu.memory_space<vmem>>, vector<1x2x256xbf16>
    %5 = vector.shape_cast %4 : vector<1x2x256xbf16> to vector<2x256xbf16>
    %c0_3 = arith.constant 0 : index
    %c0_4 = arith.constant 0 : index
    %c0_5 = arith.constant 0 : index
    %6 = vector.load %arg3[%c0_3, %c0_4, %c0_5] : memref<4x256x128xbf16, #tpu.memory_space<vmem>>, vector<1x256x128xbf16>
    %7 = vector.shape_cast %6 : vector<1x256x128xbf16> to vector<256x128xbf16>
    %cst_6 = arith.constant dense<0.000000e+00> : vector<2x128xf32>
    %8 = tpu.matmul %5, %7, %cst_6 {dimension_numbers = #tpu.dot_dimension_numbers<[1], [0], [0], [1], [0, 0, 1, 1], [], []>} : vector<2x256xbf16>, vector<256x128xbf16>, vector<2x128xf32> -> vector<2x128xf32>
    %9 = arith.addf %3, %8 : vector<2x128xf32>
    %c1 = arith.constant 1 : index
    %c0_7 = arith.constant 0 : index
    %c0_8 = arith.constant 0 : index
    %10 = vector.load %arg2[%c1, %c0_7, %c0_8] : memref<4x2x256xbf16, #tpu.memory_space<vmem>>, vector<1x2x256xbf16>
    %11 = vector.shape_cast %10 : vector<1x2x256xbf16> to vector<2x256xbf16>
    %c1_9 = arith.constant 1 : index
    %c0_10 = arith.constant 0 : index
    %c0_11 = arith.constant 0 : index
    %12 = vector.load %arg3[%c1_9, %c0_10, %c0_11] : memref<4x256x128xbf16, #tpu.memory_space<vmem>>, vector<1x256x128xbf16>
    %13 = vector.shape_cast %12 : vector<1x256x128xbf16> to vector<256x128xbf16>
    %cst_12 = arith.constant dense<0.000000e+00> : vector<2x128xf32>
    %14 = tpu.matmul %11, %13, %cst_12 {dimension_numbers = #tpu.dot_dimension_numbers<[1], [0], [0], [1], [0, 0, 1, 1], [], []>} : vector<2x256xbf16>, vector<256x128xbf16>, vector<2x128xf32> -> vector<2x128xf32>
    %15 = arith.addf %9, %14 : vector<2x128xf32>
    %c2 = arith.constant 2 : index
    %c0_13 = arith.constant 0 : index
    %c0_14 = arith.constant 0 : index
    %16 = vector.load %arg2[%c2, %c0_13, %c0_14] : memref<4x2x256xbf16, #tpu.memory_space<vmem>>, vector<1x2x256xbf16>
    %17 = vector.shape_cast %16 : vector<1x2x256xbf16> to vector<2x256xbf16>
    %c2_15 = arith.constant 2 : index
    %c0_16 = arith.constant 0 : index
    %c0_17 = arith.constant 0 : index
    %18 = vector.load %arg3[%c2_15, %c0_16, %c0_17] : memref<4x256x128xbf16, #tpu.memory_space<vmem>>, vector<1x256x128xbf16>
    %19 = vector.shape_cast %18 : vector<1x256x128xbf16> to vector<256x128xbf16>
    %cst_18 = arith.constant dense<0.000000e+00> : vector<2x128xf32>
    %20 = tpu.matmul %17, %19, %cst_18 {dimension_numbers = #tpu.dot_dimension_numbers<[1], [0], [0], [1], [0, 0, 1, 1], [], []>} : vector<2x256xbf16>, vector<256x128xbf16>, vector<2x128xf32> -> vector<2x128xf32>
    %21 = arith.addf %15, %20 : vector<2x128xf32>
    %c3 = arith.constant 3 : index
    %c0_19 = arith.constant 0 : index
    %c0_20 = arith.constant 0 : index
    %22 = vector.load %arg2[%c3, %c0_19, %c0_20] : memref<4x2x256xbf16, #tpu.memory_space<vmem>>, vector<1x2x256xbf16>
    %23 = vector.shape_cast %22 : vector<1x2x256xbf16> to vector<2x256xbf16>
    %c3_21 = arith.constant 3 : index
    %c0_22 = arith.constant 0 : index
    %c0_23 = arith.constant 0 : index
    %24 = vector.load %arg3[%c3_21, %c0_22, %c0_23] : memref<4x256x128xbf16, #tpu.memory_space<vmem>>, vector<1x256x128xbf16>
    %25 = vector.shape_cast %24 : vector<1x256x128xbf16> to vector<256x128xbf16>
    %cst_24 = arith.constant dense<0.000000e+00> : vector<2x128xf32>
    %26 = tpu.matmul %23, %25, %cst_24 {dimension_numbers = #tpu.dot_dimension_numbers<[1], [0], [0], [1], [0, 0, 1, 1], [], []>} : vector<2x256xbf16>, vector<256x128xbf16>, vector<2x128xf32> -> vector<2x128xf32>
    %27 = arith.addf %21, %26 : vector<2x128xf32>
    %c0_25 = arith.constant 0 : index
    %c0_26 = arith.constant 0 : index
    %28 = vector.load %arg5[%c0_25, %c0_26] : memref<2x128xf32, #tpu.memory_space<vmem>>, vector<2x128xf32>
    %29 = arith.addf %28, %27 : vector<2x128xf32>
    %c0_27 = arith.constant 0 : index
    %c0_28 = arith.constant 0 : index
    %30 = vector.load %arg5[%c0_27, %c0_28] : memref<2x128xf32, #tpu.memory_space<vmem>>, vector<2x128xf32>
    tpu.vector_store %arg5[%c0_27, %c0_28], %29 {strides = array<i32>} : memref<2x128xf32, #tpu.memory_space<vmem>>, vector<2x128xf32>,
    %c7_i32 = arith.constant 7 : i32
    %31 = arith.cmpi eq, %arg1, %c7_i32 : i32
    %32 = arith.extui %31 : i1 to i32
    %c0_i32_29 = arith.constant 0 : i32
    %33 = arith.cmpi ne, %32, %c0_i32_29 : i32
    scf.if %33 {
      %c0_30 = arith.constant 0 : index
      %c0_31 = arith.constant 0 : index
      %34 = vector.load %arg5[%c0_30, %c0_31] : memref<2x128xf32, #tpu.memory_space<vmem>>, vector<2x128xf32>
      %c0_32 = arith.constant 0 : index
      %c0_33 = arith.constant 0 : index
      %c0_34 = arith.constant 0 : index
      %35 = vector.load %arg4[%c0_32, %c0_33, %c0_34] : memref<1x2x128xf32, #tpu.memory_space<vmem>>, vector<1x2x128xf32>
      %36 = vector.shape_cast %35 : vector<1x2x128xf32> to vector<2x128xf32>
      %37 = vector.shape_cast %34 : vector<2x128xf32> to vector<1x2x128xf32>
      tpu.vector_store %arg4[%c0_32, %c0_33, %c0_34], %37 {strides = array<i32>} : memref<1x2x128xf32, #tpu.memory_space<vmem>>, vector<1x2x128xf32>,
    } else {
    }
    return
  }
  func.func @transform_0(%arg0: i32, %arg1: i32) -> (i32, i32, i32) {
    %c8_i32 = arith.constant 8 : i32
    %0 = arith.muli %arg0, %c8_i32 : i32
    %1 = arith.addi %0, %arg1 : i32
    %c0_i32 = arith.constant 0 : i32
    %c0_i32_0 = arith.constant 0 : i32
    %c0_i32_1 = arith.constant 0 : i32
    return %1, %c0_i32, %c0_i32_0 : i32, i32, i32
  }
  func.func @transform_1(%arg0: i32, %arg1: i32) -> (i32, i32, i32) {
    %c8_i32 = arith.constant 8 : i32
    %0 = arith.muli %arg0, %c8_i32 : i32
    %1 = arith.addi %0, %arg1 : i32
    %c0_i32 = arith.constant 0 : i32
    %c0_i32_0 = arith.constant 0 : i32
    %c0_i32_1 = arith.constant 0 : i32
    return %1, %c0_i32, %c0_i32_0 : i32, i32, i32
  }
  func.func @transform_2(%arg0: i32, %arg1: i32) -> (i32, i32, i32) {
    %c0_i32 = arith.constant 0 : i32
    %c0_i32_0 = arith.constant 0 : i32
    %c0_i32_1 = arith.constant 0 : i32
    return %arg0, %c0_i32, %c0_i32_0 : i32, i32, i32
  }
}

module attributes {stable_mosaic.version = 11 : i64} {
  func.func @_conv_kernel(%arg0: i32, %arg1: memref<1x1x256xf32, #tpu.memory_space<vmem>>, %arg2: memref<32x3xf32, #tpu.memory_space<vmem>>, %arg3: memref<32x1xf32, #tpu.memory_space<vmem>>, %arg4: memref<64x96xf32, #tpu.memory_space<vmem>>, %arg5: memref<64x1xf32, #tpu.memory_space<vmem>>, %arg6: memref<1x64x256xbf16, #tpu.memory_space<vmem>>) attributes {dimension_semantics = [#tpu.dimension_semantics<parallel>], iteration_bounds = array<i64: 2>, scalar_prefetch = 0 : i64, scratch_operands = 0 : i64, tpu.core_type = #tpu.core_type<tc>, window_params = [{transform_indices = @transform_0, window_bounds = array<i64: 1, 1, 256>}, {pipeline_mode = #tpu.pipeline_mode<synchronous>, transform_indices = @transform_1, window_bounds = array<i64: 32, 3>}, {pipeline_mode = #tpu.pipeline_mode<synchronous>, transform_indices = @transform_2, window_bounds = array<i64: 32, 1>}, {pipeline_mode = #tpu.pipeline_mode<synchronous>, transform_indices = @transform_3, window_bounds = array<i64: 64, 96>}, {pipeline_mode = #tpu.pipeline_mode<synchronous>, transform_indices = @transform_4, window_bounds = array<i64: 64, 1>}, {transform_indices = @transform_5, window_bounds = array<i64: 1, 64, 256>}]} {
    %c0 = arith.constant 0 : index
    %c0_0 = arith.constant 0 : index
    %c0_1 = arith.constant 0 : index
    %0 = vector.load %arg1[%c0, %c0_0, %c0_1] : memref<1x1x256xf32, #tpu.memory_space<vmem>>, vector<1x1x256xf32>
    %1 = vector.shape_cast %0 : vector<1x1x256xf32> to vector<1x256xf32>
    %c0_2 = arith.constant 0 : index
    %c0_3 = arith.constant 0 : index
    %2 = vector.load %arg2[%c0_2, %c0_3] : memref<32x3xf32, #tpu.memory_space<vmem>>, vector<32x3xf32>
    %3 = tpu.iota {dimensions = array<i32: 1>} : vector<1x256xi32>
    %c0_i32 = arith.constant 0 : i32
    %4 = vector.broadcast %c0_i32 : i32 to vector<1x256xi32>
    %5 = arith.cmpi eq, %3, %4 : vector<1x256xi32>
    %6 = vector.extract_strided_slice %1 {offsets = [0, 255], sizes = [1, 1], strides = [1, 1]} : vector<1x256xf32> to vector<1x1xf32>
    %7 = vector.extract_strided_slice %1 {offsets = [0, 0], sizes = [1, 255], strides = [1, 1]} : vector<1x256xf32> to vector<1x255xf32>
    %8 = tpu.concatenate %6, %7 in 1 : vector<1x1xf32>, vector<1x255xf32> -> vector<1x256xf32>
    %cst = arith.constant 0.000000e+00 : f32
    %9 = vector.broadcast %cst : f32 to vector<1x256xf32>
    %10 = arith.select %5, %9, %8 : vector<1x256xi1>, vector<1x256xf32>
    %c255_i32 = arith.constant 255 : i32
    %11 = vector.broadcast %c255_i32 : i32 to vector<1x256xi32>
    %12 = arith.cmpi eq, %3, %11 : vector<1x256xi32>
    %13 = vector.extract_strided_slice %1 {offsets = [0, 1], sizes = [1, 255], strides = [1, 1]} : vector<1x256xf32> to vector<1x255xf32>
    %14 = vector.extract_strided_slice %1 {offsets = [0, 0], sizes = [1, 1], strides = [1, 1]} : vector<1x256xf32> to vector<1x1xf32>
    %15 = tpu.concatenate %13, %14 in 1 : vector<1x255xf32>, vector<1x1xf32> -> vector<1x256xf32>
    %cst_4 = arith.constant 0.000000e+00 : f32
    %16 = vector.broadcast %cst_4 : f32 to vector<1x256xf32>
    %17 = arith.select %12, %16, %15 : vector<1x256xi1>, vector<1x256xf32>
    %18 = tpu.concatenate %10, %1, %17 in 0 : vector<1x256xf32>, vector<1x256xf32>, vector<1x256xf32> -> vector<3x256xf32>
    %cst_5 = arith.constant dense<0.000000e+00> : vector<32x256xf32>
    %19 = tpu.matmul %2, %18, %cst_5 {dimension_numbers = #tpu.dot_dimension_numbers<[1], [0], [0], [1], [0, 0, 1, 1], [], []>} : vector<32x3xf32>, vector<3x256xf32>, vector<32x256xf32> -> vector<32x256xf32>
    %c0_6 = arith.constant 0 : index
    %c0_7 = arith.constant 0 : index
    %20 = vector.load %arg3[%c0_6, %c0_7] : memref<32x1xf32, #tpu.memory_space<vmem>>, vector<32x1xf32>
    %21 = vector.broadcast %20 : vector<32x1xf32> to vector<32x256xf32>
    %22 = arith.addf %19, %21 : vector<32x256xf32>
    %cst_8 = arith.constant 0.000000e+00 : f32
    %23 = vector.broadcast %cst_8 : f32 to vector<32x256xf32>
    %24 = arith.cmpf ogt, %22, %23 : vector<32x256xf32>
    %cst_9 = arith.constant 0.00999999977 : f32
    %25 = vector.broadcast %cst_9 : f32 to vector<32x256xf32>
    %26 = arith.mulf %25, %22 : vector<32x256xf32>
    %27 = arith.select %24, %22, %26 : vector<32x256xi1>, vector<32x256xf32>
    %c0_10 = arith.constant 0 : index
    %c0_11 = arith.constant 0 : index
    %28 = vector.load %arg4[%c0_10, %c0_11] : memref<64x96xf32, #tpu.memory_space<vmem>>, vector<64x96xf32>
    %29 = tpu.iota {dimensions = array<i32: 1>} : vector<32x256xi32>
    %c0_i32_12 = arith.constant 0 : i32
    %30 = vector.broadcast %c0_i32_12 : i32 to vector<32x256xi32>
    %31 = arith.cmpi eq, %29, %30 : vector<32x256xi32>
    %32 = vector.extract_strided_slice %27 {offsets = [0, 255], sizes = [32, 1], strides = [1, 1]} : vector<32x256xf32> to vector<32x1xf32>
    %33 = vector.extract_strided_slice %27 {offsets = [0, 0], sizes = [32, 255], strides = [1, 1]} : vector<32x256xf32> to vector<32x255xf32>
    %34 = tpu.concatenate %32, %33 in 1 : vector<32x1xf32>, vector<32x255xf32> -> vector<32x256xf32>
    %cst_13 = arith.constant 0.000000e+00 : f32
    %35 = vector.broadcast %cst_13 : f32 to vector<32x256xf32>
    %36 = arith.select %31, %35, %34 : vector<32x256xi1>, vector<32x256xf32>
    %c255_i32_14 = arith.constant 255 : i32
    %37 = vector.broadcast %c255_i32_14 : i32 to vector<32x256xi32>
    %38 = arith.cmpi eq, %29, %37 : vector<32x256xi32>
    %39 = vector.extract_strided_slice %27 {offsets = [0, 1], sizes = [32, 255], strides = [1, 1]} : vector<32x256xf32> to vector<32x255xf32>
    %40 = vector.extract_strided_slice %27 {offsets = [0, 0], sizes = [32, 1], strides = [1, 1]} : vector<32x256xf32> to vector<32x1xf32>
    %41 = tpu.concatenate %39, %40 in 1 : vector<32x255xf32>, vector<32x1xf32> -> vector<32x256xf32>
    %cst_15 = arith.constant 0.000000e+00 : f32
    %42 = vector.broadcast %cst_15 : f32 to vector<32x256xf32>
    %43 = arith.select %38, %42, %41 : vector<32x256xi1>, vector<32x256xf32>
    %44 = tpu.concatenate %36, %27, %43 in 0 : vector<32x256xf32>, vector<32x256xf32>, vector<32x256xf32> -> vector<96x256xf32>
    %cst_16 = arith.constant dense<0.000000e+00> : vector<64x256xf32>
    %45 = tpu.matmul %28, %44, %cst_16 {dimension_numbers = #tpu.dot_dimension_numbers<[1], [0], [0], [1], [0, 0, 1, 1], [], []>} : vector<64x96xf32>, vector<96x256xf32>, vector<64x256xf32> -> vector<64x256xf32>
    %c0_17 = arith.constant 0 : index
    %c0_18 = arith.constant 0 : index
    %46 = vector.load %arg5[%c0_17, %c0_18] : memref<64x1xf32, #tpu.memory_space<vmem>>, vector<64x1xf32>
    %47 = vector.broadcast %46 : vector<64x1xf32> to vector<64x256xf32>
    %48 = arith.addf %45, %47 : vector<64x256xf32>
    %cst_19 = arith.constant 0.000000e+00 : f32
    %49 = vector.broadcast %cst_19 : f32 to vector<64x256xf32>
    %50 = arith.cmpf ogt, %48, %49 : vector<64x256xf32>
    %cst_20 = arith.constant 0.00999999977 : f32
    %51 = vector.broadcast %cst_20 : f32 to vector<64x256xf32>
    %52 = arith.mulf %51, %48 : vector<64x256xf32>
    %53 = arith.select %50, %48, %52 : vector<64x256xi1>, vector<64x256xf32>
    %54 = arith.truncf %53 : vector<64x256xf32> to vector<64x256xbf16>
    %c0_21 = arith.constant 0 : index
    %c0_22 = arith.constant 0 : index
    %c0_23 = arith.constant 0 : index
    %55 = vector.load %arg6[%c0_21, %c0_22, %c0_23] : memref<1x64x256xbf16, #tpu.memory_space<vmem>>, vector<1x64x256xbf16>
    %56 = vector.shape_cast %55 : vector<1x64x256xbf16> to vector<64x256xbf16>
    %57 = vector.shape_cast %54 : vector<64x256xbf16> to vector<1x64x256xbf16>
    tpu.vector_store %arg6[%c0_21, %c0_22, %c0_23], %57 {strides = array<i32>} : memref<1x64x256xbf16, #tpu.memory_space<vmem>>, vector<1x64x256xbf16>,
    return
  }
  func.func @transform_0(%arg0: i32) -> (i32, i32, i32) {
    %c0_i32 = arith.constant 0 : i32
    %c0_i32_0 = arith.constant 0 : i32
    %c0_i32_1 = arith.constant 0 : i32
    return %arg0, %c0_i32, %c0_i32_0 : i32, i32, i32
  }
  func.func @transform_1(%arg0: i32) -> (i32, i32) {
    %c0_i32 = arith.constant 0 : i32
    %c0_i32_0 = arith.constant 0 : i32
    %c0_i32_1 = arith.constant 0 : i32
    return %c0_i32, %c0_i32_0 : i32, i32
  }
  func.func @transform_2(%arg0: i32) -> (i32, i32) {
    %c0_i32 = arith.constant 0 : i32
    %c0_i32_0 = arith.constant 0 : i32
    %c0_i32_1 = arith.constant 0 : i32
    return %c0_i32, %c0_i32_0 : i32, i32
  }
  func.func @transform_3(%arg0: i32) -> (i32, i32) {
    %c0_i32 = arith.constant 0 : i32
    %c0_i32_0 = arith.constant 0 : i32
    %c0_i32_1 = arith.constant 0 : i32
    return %c0_i32, %c0_i32_0 : i32, i32
  }
  func.func @transform_4(%arg0: i32) -> (i32, i32) {
    %c0_i32 = arith.constant 0 : i32
    %c0_i32_0 = arith.constant 0 : i32
    %c0_i32_1 = arith.constant 0 : i32
    return %c0_i32, %c0_i32_0 : i32, i32
  }
  func.func @transform_5(%arg0: i32) -> (i32, i32, i32) {
    %c0_i32 = arith.constant 0 : i32
    %c0_i32_0 = arith.constant 0 : i32
    %c0_i32_1 = arith.constant 0 : i32
    return %arg0, %c0_i32, %c0_i32_0 : i32, i32, i32
  }
}

</mosaic_0001>

<llo_original>
// kernel: cnn_forward.2
$region0: #{cnn_forward.2}
  #allocation0 [shape = 'u32[]', space=smem, size = 0x4, offset = 0x4, fixed_abs, tag = 'smem constant byte address 0x4 - core index']
  #allocation1 [shape = 'u32[72,128]{1,0:T(1,128)}', space=vmem, size = 0x9000, scoped, tag = 'internal scratch']
  %s0 = inlined_call_operand.hbm [shape: f32[2,1,256], index: 0, kind: input, shape index: {}]
  %s1 = inlined_call_operand.vmem [shape: f32[32,3], index: 1, kind: input, shape index: {}]
  %s2 = inlined_call_operand.vmem [shape: f32[32,1], index: 2, kind: input, shape index: {}]
  %s3 = inlined_call_operand.hbm [shape: f32[64,96], index: 3, kind: input, shape index: {}]
  %s4 = inlined_call_operand.vmem [shape: f32[64,1], index: 4, kind: input, shape index: {}]
  %s5 = inlined_call_operand.vmem [shape: bf16[2,64,256], index: 5, kind: output, shape index: {}]
  %s6 = sld [smem:[#allocation0]]
  $region61: #{cnn_forward.2} parent=0
    _
  %s8 = ssub.s32 1, %s6
  %s9 = scalar_select 0, %s8, %s6
  $region1: #{cnn_forward.2} parent=0
    #allocation2 [shape = 'u8[2048]{0}', space=vmem, size = 0x800, scoped, tag = 'input window, operand 0']
    #allocation3 [shape = 's32[2]{0}', space=sflag, size = 0x8, scoped, tag = 'scoped memory for cnn_forward.2']
    #allocation4 [shape = 'u8[32768]{0}', space=vmem, size = 0x8000, scoped, tag = 'input window, operand 3, single buffered']
    #allocation5 [shape = 's32[1]{0}', space=sflag, size = 0x4, scoped, tag = 'scoped memory for cnn_forward.2']
    %10 = vsyncpa [#allocation3], 0
    %s11 = scalar_lea.sflag [#allocation3], 1
    %12 = vsyncpa %s11, 0
    %13 = vsyncpa [#allocation5], 0
    loop: start=0, step=1, limit=4
    $region2: #{cnn_forward.2} parent=1 // loop_pre_header
      _
    $region3: #{cnn_forward.2} parent=1 // loop_header
      %s15 = sphi 0, %s19
      %p16 = scmp.ge.s32.totalorder %s15, 4
      %s25 = sphi 0, %s27
      %s28 = sphi 0, %s25
      %s29 = sphi 0, %s28
      %s45 = sphi 0, %s29
      %s49 = sphi 0, %s49
      %s51 = sphi 0, %s49
      %s52 = sphi 0, %s51
      %s66 = sphi 0, %s52
      %s70 = sphi 0, %s70
      %s72 = sphi 0, %s70
      %s73 = sphi 0, %s72
      %s87 = sphi 0, %s73
      %s91 = sphi 0, %s91
      %s93 = sphi 0, %s91
      %s94 = sphi 0, %s93
      %s108 = sphi 0, %s94
      %s112 = sphi 0, %s112
      %s114 = sphi 0, %s112
      %s115 = sphi 0, %s114
      %s129 = sphi 0, %s115
      %s135 = sphi 0, %s137
      %s138 = sphi 0, %s135
      %s139 = sphi 0, %s138
      %s155 = sphi 0, %s139
    $region4: #{cnn_forward.2} parent=1 // loop_header_branch
      %18 = sbr.rel (%p16) target = $region8
    $region5: #{cnn_forward.2} parent=1 // loop_body
      %s20 = ssub.s32 %s15, 1
      %s21 = ssub.s32 %s15, 2
      %s22 = sadd.s32 %s15, 1
      %s23 = ssub.s32 %s15, %s22
      %p24 = scmp.eq.s32.totalorder %s23, 0
      %s26 = sadd.s32 %s25, 1
      %s27 = scalar_select %p24, %s25, %s26
      %p30 = pneg %p24
      %p31 = scmp.eq.s32.totalorder %s15, 1
      %p32 = por %p30, %p31
      %p33 = scmp.ne.s32.totalorder %s25, %s28
      %p34 = scmp.eq.s32.totalorder %s15, 0
      %p35 = por %p33, %p34
      %p36 = scmp.ne.s32.totalorder %s25, %s28
      %p37 = scmp.eq.s32.totalorder %s20, 1
      %p38 = por %p36, %p37
      %p39 = scmp.ne.s32.totalorder %s28, %s29
      %p40 = scmp.eq.s32.totalorder %s20, 0
      %p41 = por %p39, %p40
      %p42 = scmp.ne.s32.totalorder %s28, %s29
      %p43 = scmp.eq.s32.totalorder %s21, 1
      %p44 = por %p42, %p43
      %p46 = scmp.ne.s32.totalorder %s29, %s45
      %p47 = scmp.eq.s32.totalorder %s21, 0
      %p48 = por %p46, %p47
      %s50 = sadd.s32 %s49, 1
      %p53 = scmp.eq.s32.totalorder %s15, 1
      %p54 = scmp.ne.s32.totalorder %s49, %s51
      %p55 = scmp.eq.s32.totalorder %s15, 0
      %p56 = por %p54, %p55
      %p57 = scmp.ne.s32.totalorder %s49, %s51
      %p58 = scmp.eq.s32.totalorder %s20, 1
      %p59 = por %p57, %p58
      %p60 = scmp.ne.s32.totalorder %s51, %s52
      %p61 = scmp.eq.s32.totalorder %s20, 0
      %p62 = por %p60, %p61
      %p63 = scmp.ne.s32.totalorder %s51, %s52
      %p64 = scmp.eq.s32.totalorder %s21, 1
      %p65 = por %p63, %p64
      %p67 = scmp.ne.s32.totalorder %s52, %s66
      %p68 = scmp.eq.s32.totalorder %s21, 0
      %p69 = por %p67, %p68
      %s71 = sadd.s32 %s70, 1
      %p74 = scmp.eq.s32.totalorder %s15, 1
      %p75 = scmp.ne.s32.totalorder %s70, %s72
      %p76 = scmp.eq.s32.totalorder %s15, 0
      %p77 = por %p75, %p76
      %p78 = scmp.ne.s32.totalorder %s70, %s72
      %p79 = scmp.eq.s32.totalorder %s20, 1
      %p80 = por %p78, %p79
      %p81 = scmp.ne.s32.totalorder %s72, %s73
      %p82 = scmp.eq.s32.totalorder %s20, 0
      %p83 = por %p81, %p82
      %p84 = scmp.ne.s32.totalorder %s72, %s73
      %p85 = scmp.eq.s32.totalorder %s21, 1
      %p86 = por %p84, %p85
      %p88 = scmp.ne.s32.totalorder %s73, %s87
      %p89 = scmp.eq.s32.totalorder %s21, 0
      %p90 = por %p88, %p89
      %s92 = sadd.s32 %s91, 1
      %p95 = scmp.eq.s32.totalorder %s15, 1
      %p96 = scmp.ne.s32.totalorder %s91, %s93
      %p97 = scmp.eq.s32.totalorder %s15, 0
      %p98 = por %p96, %p97
      %p99 = scmp.ne.s32.totalorder %s91, %s93
      %p100 = scmp.eq.s32.totalorder %s20, 1
      %p101 = por %p99, %p100
      %p102 = scmp.ne.s32.totalorder %s93, %s94
      %p103 = scmp.eq.s32.totalorder %s20, 0
      %p104 = por %p102, %p103
      %p105 = scmp.ne.s32.totalorder %s93, %s94
      %p106 = scmp.eq.s32.totalorder %s21, 1
      %p107 = por %p105, %p106
      %p109 = scmp.ne.s32.totalorder %s94, %s108
      %p110 = scmp.eq.s32.totalorder %s21, 0
      %p111 = por %p109, %p110
      %s113 = sadd.s32 %s112, 1
      %p116 = scmp.eq.s32.totalorder %s15, 1
      %p117 = scmp.ne.s32.totalorder %s112, %s114
      %p118 = scmp.eq.s32.totalorder %s15, 0
      %p119 = por %p117, %p118
      %p120 = scmp.ne.s32.totalorder %s112, %s114
      %p121 = scmp.eq.s32.totalorder %s20, 1
      %p122 = por %p120, %p121
      %p123 = scmp.ne.s32.totalorder %s114, %s115
      %p124 = scmp.eq.s32.totalorder %s20, 0
      %p125 = por %p123, %p124
      %p126 = scmp.ne.s32.totalorder %s114, %s115
      %p127 = scmp.eq.s32.totalorder %s21, 1
      %p128 = por %p126, %p127
      %p130 = scmp.ne.s32.totalorder %s115, %s129
      %p131 = scmp.eq.s32.totalorder %s21, 0
      %p132 = por %p130, %p131
      %s133 = ssub.s32 %s15, %s22
      %p134 = scmp.eq.s32.totalorder %s133, 0
      %s136 = sadd.s32 %s135, 1
      %s137 = scalar_select %p134, %s135, %s136
      %p140 = pneg %p134
      %p141 = scmp.eq.s32.totalorder %s15, 1
      %p142 = por %p140, %p141
      %p143 = scmp.ne.s32.totalorder %s135, %s138
      %p144 = scmp.eq.s32.totalorder %s15, 0
      %p145 = por %p143, %p144
      %p146 = scmp.ne.s32.totalorder %s135, %s138
      %p147 = scmp.eq.s32.totalorder %s20, 1
      %p148 = por %p146, %p147
      %p149 = scmp.ne.s32.totalorder %s138, %s139
      %p150 = scmp.eq.s32.totalorder %s20, 0
      %p151 = por %p149, %p150
      %p152 = scmp.ne.s32.totalorder %s138, %s139
      %p153 = scmp.eq.s32.totalorder %s21, 1
      %p154 = por %p152, %p153
      %p156 = scmp.ne.s32.totalorder %s139, %s155
      %p157 = scmp.eq.s32.totalorder %s21, 0
      %p158 = por %p156, %p157
      %p159 = scmp.le.s32.totalorder 1, %s15
      %p160 = scmp.lt.s32.totalorder %s15, 3
      %p161 = pnand %p159, %p160
      %p162 = pneg %p161
      // Predicated region
      $region9: #{cnn_forward.2} parent=5 // pred_check
        _
      $region10: #{cnn_forward.2} parent=5 // pred_check_branch
        %164 = sbr.rel (%p161) target = $region12
      $region11: #{cnn_forward.2} parent=5 // pred_region
        %s165 = ssub.s32 %s15, 1
        // Predicated region
        $region13: #{cnn_forward.2} parent=11 // pred_check
          %p166 = pneg %p62
        $region14: #{cnn_forward.2} parent=11 // pred_check_branch
          %168 = sbr.rel (%p166) target = $region16
        $region15: #{cnn_forward.2} parent=11 // pred_region
          _
        $region16: #{cnn_forward.2} parent=11 // pred_fallthru
          _
        // Predicated region
        $region17: #{cnn_forward.2} parent=11 // pred_check
          %p169 = pneg %p83
        $region18: #{cnn_forward.2} parent=11 // pred_check_branch
          %171 = sbr.rel (%p169) target = $region20
        $region19: #{cnn_forward.2} parent=11 // pred_region
          _
        $region20: #{cnn_forward.2} parent=11 // pred_fallthru
          _
        // Predicated region
        $region21: #{cnn_forward.2} parent=11 // pred_check
          %p172 = pneg %p104
        $region22: #{cnn_forward.2} parent=11 // pred_check_branch
          %174 = sbr.rel (%p172) target = $region24
        $region23: #{cnn_forward.2} parent=11 // pred_region
          %176 = vsyncadd [#allocation5], 0
          %s177 = sshll.u32 %s3, 4
          %s178 = int_to_ptr.hbm [resolvable:$true] %s177
          %s179 = sshll.u32 [#allocation4], 4
          %s180 = int_to_ptr.vmem [resolvable:$true] %s179
          %185 = dma.hbm_to_vmem [thread:$0]  %s178, 1024, %s180, [#allocation5], 128, 128, 8
        $region24: #{cnn_forward.2} parent=11 // pred_fallthru
          _
        // Predicated region
        $region25: #{cnn_forward.2} parent=11 // pred_check
          %p186 = pneg %p125
        $region26: #{cnn_forward.2} parent=11 // pred_check_branch
          %188 = sbr.rel (%p186) target = $region28
        $region27: #{cnn_forward.2} parent=11 // pred_region
          _
        $region28: #{cnn_forward.2} parent=11 // pred_fallthru
          _
      $region12: #{cnn_forward.2} parent=5 // pred_fallthru
        _
      %p189 = scmp.lt.s32.totalorder %s15, 2
      // Predicated region
      $region29: #{cnn_forward.2} parent=5 // pred_check
        %p190 = pneg %p189
      $region30: #{cnn_forward.2} parent=5 // pred_check_branch
        %192 = sbr.rel (%p190) target = $region32
      $region31: #{cnn_forward.2} parent=5 // pred_region
        // Predicated region
        $region33: #{cnn_forward.2} parent=31 // pred_check
          %p193 = pneg %p35
        $region34: #{cnn_forward.2} parent=31 // pred_check_branch
          %195 = sbr.rel (%p193) target = $region36
        $region35: #{cnn_forward.2} parent=31 // pred_region
          %s196 = sand.u32 %s25, 1
          %s197 = scalar_lea.sflag [#allocation3], %s196
          %s198 = sand.u32 %s25, 1
          %s199 = smul.addr %s198, 2
          %s200 = scalar_lea.vmem [#allocation2], %s199
          %202 = vsyncadd %s197, 0
          %s203 = smul.addr %s15, 2
          %s204 = scalar_lea.hbm %s0, %s203
          %s206 = sshll.u32 %s204, 4
          %s207 = int_to_ptr.hbm [resolvable:$true] %s206
          %s208 = sshll.u32 %s200, 4
          %s209 = int_to_ptr.vmem [resolvable:$true] %s208
          %211 = dma.hbm_to_vmem [thread:$0]  %s207, 32, %s209, %s197
        $region36: #{cnn_forward.2} parent=31 // pred_fallthru
          _
      $region32: #{cnn_forward.2} parent=5 // pred_fallthru
        _
      %p212 = scmp.le.s32.totalorder 1, %s15
      %p213 = scmp.lt.s32.totalorder %s15, 3
      %p214 = pnand %p212, %p213
      %p215 = pneg %p214
      // Predicated region
      $region37: #{cnn_forward.2} parent=5 // pred_check
        _
      $region38: #{cnn_forward.2} parent=5 // pred_check_branch
        %217 = sbr.rel (%p214) target = $region40
      $region39: #{cnn_forward.2} parent=5 // pred_region
        %s218 = ssub.s32 %s15, 1
        %s219 = sand.u32 %s28, 1
        %s220 = scalar_lea.sflag [#allocation3], %s219
        %s221 = sand.u32 %s28, 1
        %s222 = smul.addr %s221, 2
        %s223 = scalar_lea.vmem [#allocation2], %s222
        // Predicated region
        $region41: #{cnn_forward.2} parent=39 // pred_check
          %p224 = pneg %p41
        $region42: #{cnn_forward.2} parent=39 // pred_check_branch
          %226 = sbr.rel (%p224) target = $region44
        $region43: #{cnn_forward.2} parent=39 // pred_region
          %228 = dma.done %s220, 32
        $region44: #{cnn_forward.2} parent=39 // pred_fallthru
          _
        // Predicated region
        $region45: #{cnn_forward.2} parent=39 // pred_check
          %p229 = pneg %p104
        $region46: #{cnn_forward.2} parent=39 // pred_check_branch
          %231 = sbr.rel (%p229) target = $region48
        $region47: #{cnn_forward.2} parent=39 // pred_region
          %233 = dma.done [#allocation5], 1024
        $region48: #{cnn_forward.2} parent=39 // pred_fallthru
          _
        %s234 = sand.u32 %s28, 1
        %s235 = scalar_lea.sflag [#allocation3], %s234
        %s236 = sand.u32 %s28, 1
        %s237 = smul.addr %s236, 2
        %s238 = scalar_lea.vmem [#allocation2], %s237
        %p239 = pneg %p41
        %p240 = pneg %p38
        %p241 = pneg %p62
        %p242 = pneg %p59
        %p243 = pneg %p83
        %p244 = pneg %p80
        %p245 = pneg %p104
        %p246 = pneg %p101
        %p247 = pneg %p125
        %p248 = pneg %p122
        %p249 = pneg %p151
        %p250 = pneg %p148
        %p251 = scmp.lt.s32.totalorder %s20, 1
        %s252 = scalar_select %p251, %s20, 1
        %s253 = smul.addr %s252, 16
        %s254 = smul.addr %s253, 4
        %s255 = scalar_lea.vmem %s5, %s254
        %p256 = scmp.lt.s32.totalorder %s20, 1
        %s257 = scalar_select %p256, %s20, 1
        %s258 = smul.addr %s257, 16
        %s259 = smul.addr %s258, 4
        %s260 = scalar_lea.vmem %s5, %s259
        %v261 = vld [vmem:[%s223] sm:$0x3]
        %v262 = vld [vmem:[%s1] sm:$0xff]
        %v263 = vld [vmem:[%s1 + $0x8] sm:$0xff]
        %v264 = vld [vmem:[%s1 + $0x10] sm:$0xff]
        %v265 = vld [vmem:[%s1 + $0x18] sm:$0xff]
        %v266 = vlaneseq
        %v267 = vand.u32 %v266, 127
        %v268 = vadd.s32 %v267, 128
        %vm269 = vcmp.eq.s32.totalorder %v267, 0
        %vm270 = vcmp.eq.s32.totalorder %v268, 0
        %v272 = vperm.slane %v261, 1
        %273 = vrot.lane.b32.xlu0 %v272, 1
        %v274 = vpop.permute.xlu0 %273
        %v276 = vperm.slane %v261, 0
        %277 = vrot.lane.b32.xlu0 %v276, 1
        %v278 = vpop.permute.xlu0 %277
        %vm279 = vcmask 7168
        %v280 = vsel %vm279, %v278, %v274
        %v283 = vsel %vm279, %v274, %v278
        %v284 = vsel %vm269, 0.0, %v283
        %v285 = vsel %vm270, 0.0, %v280
        %vm286 = vcmp.eq.s32.totalorder %v267, 255
        %vm287 = vcmp.eq.s32.totalorder %v268, 255
        %288 = vrot.lane.b32.xlu0 %v276, 127
        %v289 = vpop.permute.xlu0 %288
        %290 = vrot.lane.b32.xlu0 %v272, 127
        %v291 = vpop.permute.xlu0 %290
        %vm292 = vcmask 1039360
        %v293 = vsel %vm292, %v289, %v291
        %v297 = vsel %vm292, %v291, %v289
        %v298 = vsel %vm286, 0.0, %v293
        %v299 = vsel %vm287, 0.0, %v297
        %v304 = vrot.slane %v298, 6
        %v305 = vrot.slane %v299, 6
        %vm308 = vcmask 1040384
        %v309 = vsel %vm308, %v284, %v276
        %v310 = vsel %vm308, %v285, %v272
        %vm311 = vcmask 1041408
        %v312 = vsel %vm311, %v309, %v304
        %v313 = vsel %vm311, %v310, %v305
        %v314 = vld [vmem:[%s2] sm:$0xff]
        %v315 = vld [vmem:[%s2 + $0x8] sm:$0xff]
        %v316 = vld [vmem:[%s2 + $0x10] sm:$0xff]
        %v317 = vld [vmem:[%s2 + $0x18] sm:$0xff]
        %319 = vset.pattern.permute.xlu0 0
        %320 = vperm.xlu0 %319, %v314
        %v321 = vpop.permute.xlu0 %320
        %324 = vset.pattern.permute.xlu0 0
        %325 = vperm.xlu0 %324, %v315
        %v326 = vpop.permute.xlu0 %325
        %329 = vset.pattern.permute.xlu0 0
        %330 = vperm.xlu0 %329, %v316
        %v331 = vpop.permute.xlu0 %330
        %334 = vset.pattern.permute.xlu0 0
        %335 = vperm.xlu0 %334, %v317
        %v336 = vpop.permute.xlu0 %335
        %vm338 = vcmask 23552
        %v340 = vsel %vm338, %v262, 0
        %v343 = vsel %vm338, %v263, 0
        %v346 = vsel %vm338, %v264, 0
        %v349 = vsel %vm338, %v265, 0
        %vm351 = vcmask 1042432
        %v353 = vsel %vm351, %v312, 0
        %v356 = vsel %vm351, %v313, 0
        %358 = vmatpush.msra.mxu0 0.0
        %359 = vmatpush.msra.mxu0 0.0
        %360 = vmatpush.msra.mxu0 0.0
        %361 = vmatpush.msra.mxu0 0.0
        %362 = vmatpush.msra.mxu0 0.0
        %363 = vmatpush.msra.mxu0 0.0
        %364 = vmatpush.msra.mxu0 0.0
        %365 = vmatpush.msra.mxu0 0.0
        %366 = vmatpush.msra.mxu0 0.0
        %367 = vmatpush.msra.mxu0 0.0
        %368 = vmatpush.msra.mxu0 0.0
        %369 = vmatpush.msra.mxu0 0.0
        %370 = vmatpush.msra.mxu0 0.0
        %371 = vmatpush.msra.mxu0 0.0
        %372 = vmatpush.msra.mxu0 0.0
        %373 = vmatpush.msra.mxu0 %v353
        %374 = vmatmul.f32.gmra.mxu0 %v340
        %v375 = vpop.f32.mrf.mxu0
        %v376 = vadd.f32 %v321, %v375
        %377 = vmatmul.f32.gmra.mxu0 %v343
        %v378 = vpop.f32.mrf.mxu0
        %v379 = vadd.f32 %v326, %v378
        %380 = vmatmul.f32.gmra.mxu0 %v346
        %v381 = vpop.f32.mrf.mxu0
        %v382 = vadd.f32 %v331, %v381
        %383 = vmatmul.f32.gmra.mxu0 %v349
        %v384 = vpop.f32.mrf.mxu0
        %v385 = vadd.f32 %v336, %v384
        %386 = vdwg.mxu0
        %387 = vmatpush.msra.mxu0 0.0
        %388 = vmatpush.msra.mxu0 0.0
        %389 = vmatpush.msra.mxu0 0.0
        %390 = vmatpush.msra.mxu0 0.0
        %391 = vmatpush.msra.mxu0 0.0
        %392 = vmatpush.msra.mxu0 0.0
        %393 = vmatpush.msra.mxu0 0.0
        %394 = vmatpush.msra.mxu0 0.0
        %395 = vmatpush.msra.mxu0 0.0
        %396 = vmatpush.msra.mxu0 0.0
        %397 = vmatpush.msra.mxu0 0.0
        %398 = vmatpush.msra.mxu0 0.0
        %399 = vmatpush.msra.mxu0 0.0
        %400 = vmatpush.msra.mxu0 0.0
        %401 = vmatpush.msra.mxu0 0.0
        %402 = vmatpush.msra.mxu0 %v356
        %403 = vmatmul.f32.gmra.mxu0 %v340
        %v404 = vpop.f32.mrf.mxu0
        %v405 = vadd.f32 %v321, %v404
        %406 = vmatmul.f32.gmra.mxu0 %v343
        %v407 = vpop.f32.mrf.mxu0
        %v408 = vadd.f32 %v326, %v407
        %409 = vmatmul.f32.gmra.mxu0 %v346
        %v410 = vpop.f32.mrf.mxu0
        %v411 = vadd.f32 %v331, %v410
        %412 = vmatmul.f32.gmra.mxu0 %v349
        %v413 = vpop.f32.mrf.mxu0
        %v414 = vadd.f32 %v336, %v413
        %415 = vdwg.mxu0
        %vm416 = vcmp.gt.f32.partialorder %v376, 0.0
        %vm417 = vcmp.gt.f32.partialorder %v405, 0.0
        %vm418 = vcmp.gt.f32.partialorder %v379, 0.0
        %vm419 = vcmp.gt.f32.partialorder %v408, 0.0
        %vm420 = vcmp.gt.f32.partialorder %v382, 0.0
        %vm421 = vcmp.gt.f32.partialorder %v411, 0.0
        %vm422 = vcmp.gt.f32.partialorder %v385, 0.0
        %vm423 = vcmp.gt.f32.partialorder %v414, 0.0
        %v424 = vmul.f32 %v376, 0.01
        %v425 = vmul.f32 %v405, 0.01
        %v426 = vmul.f32 %v379, 0.01
        %v427 = vmul.f32 %v408, 0.01
        %v428 = vmul.f32 %v382, 0.01
        %v429 = vmul.f32 %v411, 0.01
        %v430 = vmul.f32 %v385, 0.01
        %v431 = vmul.f32 %v414, 0.01
        %v432 = vsel %vm416, %v376, %v424
        %v433 = vsel %vm417, %v405, %v425
        %v434 = vsel %vm418, %v379, %v426
        %v435 = vsel %vm419, %v408, %v427
        %v436 = vsel %vm420, %v382, %v428
        %v437 = vsel %vm421, %v411, %v429
        %v438 = vsel %vm422, %v385, %v430
        %v439 = vsel %vm423, %v414, %v431
        %v440 = vld [vmem:[#allocation4] sm:$0xff]
        %v441 = vld [vmem:[#allocation4 + $0x8] sm:$0xff]
        %v442 = vld [vmem:[#allocation4 + $0x10] sm:$0xff]
        %v443 = vld [vmem:[#allocation4 + $0x18] sm:$0xff]
        %v444 = vld [vmem:[#allocation4 + $0x20] sm:$0xff]
        %v445 = vld [vmem:[#allocation4 + $0x28] sm:$0xff]
        %v446 = vld [vmem:[#allocation4 + $0x30] sm:$0xff]
        %v447 = vld [vmem:[#allocation4 + $0x38] sm:$0xff]
        %452 = vrot.lane.b32.xlu0 %v433, 1
        %v453 = vpop.permute.xlu0 %452
        %454 = vrot.lane.b32.xlu0 %v435, 1
        %v455 = vpop.permute.xlu0 %454
        %456 = vrot.lane.b32.xlu0 %v437, 1
        %v457 = vpop.permute.xlu0 %456
        %458 = vrot.lane.b32.xlu0 %v439, 1
        %v459 = vpop.permute.xlu0 %458
        %468 = vrot.lane.b32.xlu0 %v432, 1
        %v469 = vpop.permute.xlu0 %468
        %470 = vrot.lane.b32.xlu0 %v434, 1
        %v471 = vpop.permute.xlu0 %470
        %472 = vrot.lane.b32.xlu0 %v436, 1
        %v473 = vpop.permute.xlu0 %472
        %474 = vrot.lane.b32.xlu0 %v438, 1
        %v475 = vpop.permute.xlu0 %474
        %v476 = vsel %vm279, %v469, %v453
        %v477 = vsel %vm279, %v471, %v455
        %v478 = vsel %vm279, %v473, %v457
        %v479 = vsel %vm279, %v475, %v459
        %v488 = vsel %vm279, %v453, %v469
        %v489 = vsel %vm279, %v455, %v471
        %v490 = vsel %vm279, %v457, %v473
        %v491 = vsel %vm279, %v459, %v475
        %v492 = vsel %vm269, 0.0, %v488
        %v493 = vsel %vm270, 0.0, %v476
        %v494 = vsel %vm269, 0.0, %v489
        %v495 = vsel %vm270, 0.0, %v477
        %v496 = vsel %vm269, 0.0, %v490
        %v497 = vsel %vm270, 0.0, %v478
        %v498 = vsel %vm269, 0.0, %v491
        %v499 = vsel %vm270, 0.0, %v479
        %500 = vrot.lane.b32.xlu0 %v432, 127
        %v501 = vpop.permute.xlu0 %500
        %502 = vrot.lane.b32.xlu0 %v433, 127
        %v503 = vpop.permute.xlu0 %502
        %504 = vrot.lane.b32.xlu0 %v434, 127
        %v505 = vpop.permute.xlu0 %504
        %506 = vrot.lane.b32.xlu0 %v435, 127
        %v507 = vpop.permute.xlu0 %506
        %508 = vrot.lane.b32.xlu0 %v436, 127
        %v509 = vpop.permute.xlu0 %508
        %510 = vrot.lane.b32.xlu0 %v437, 127
        %v511 = vpop.permute.xlu0 %510
        %512 = vrot.lane.b32.xlu0 %v438, 127
        %v513 = vpop.permute.xlu0 %512
        %514 = vrot.lane.b32.xlu0 %v439, 127
        %v515 = vpop.permute.xlu0 %514
        %v516 = vsel %vm292, %v501, %v503
        %v517 = vsel %vm292, %v505, %v507
        %v518 = vsel %vm292, %v509, %v511
        %v519 = vsel %vm292, %v513, %v515
        %v532 = vsel %vm292, %v503, %v501
        %v533 = vsel %vm292, %v507, %v505
        %v534 = vsel %vm292, %v511, %v509
        %v535 = vsel %vm292, %v515, %v513
        %v536 = vsel %vm286, 0.0, %v516
        %v537 = vsel %vm287, 0.0, %v532
        %v538 = vsel %vm286, 0.0, %v517
        %v539 = vsel %vm287, 0.0, %v533
        %v540 = vsel %vm286, 0.0, %v518
        %v541 = vsel %vm287, 0.0, %v534
        %v542 = vsel %vm286, 0.0, %v519
        %v543 = vsel %vm287, 0.0, %v535
        %v544 = vld [vmem:[%s4] sm:$0xff]
        %v545 = vld [vmem:[%s4 + $0x8] sm:$0xff]
        %v546 = vld [vmem:[%s4 + $0x10] sm:$0xff]
        %v547 = vld [vmem:[%s4 + $0x18] sm:$0xff]
        %v548 = vld [vmem:[%s4 + $0x20] sm:$0xff]
        %v549 = vld [vmem:[%s4 + $0x28] sm:$0xff]
        %v550 = vld [vmem:[%s4 + $0x30] sm:$0xff]
        %v551 = vld [vmem:[%s4 + $0x38] sm:$0xff]
        %553 = vset.pattern.permute.xlu0 0
        %554 = vperm.xlu0 %553, %v544
        %v555 = vpop.permute.xlu0 %554
        %558 = vset.pattern.permute.xlu0 0
        %559 = vperm.xlu0 %558, %v545
        %v560 = vpop.permute.xlu0 %559
        %563 = vset.pattern.permute.xlu0 0
        %564 = vperm.xlu0 %563, %v546
        %v565 = vpop.permute.xlu0 %564
        %568 = vset.pattern.permute.xlu0 0
        %569 = vperm.xlu0 %568, %v547
        %v570 = vpop.permute.xlu0 %569
        %573 = vset.pattern.permute.xlu0 0
        %574 = vperm.xlu0 %573, %v548
        %v575 = vpop.permute.xlu0 %574
        %578 = vset.pattern.permute.xlu0 0
        %579 = vperm.xlu0 %578, %v549
        %v580 = vpop.permute.xlu0 %579
        %583 = vset.pattern.permute.xlu0 0
        %584 = vperm.xlu0 %583, %v550
        %v585 = vpop.permute.xlu0 %584
        %588 = vset.pattern.permute.xlu0 0
        %589 = vperm.xlu0 %588, %v551
        %v590 = vpop.permute.xlu0 %589
        %vm592 = vcmask 785408
        %v594 = vsel %vm592, %v440, 0
        %v597 = vsel %vm592, %v441, 0
        %v600 = vsel %vm592, %v442, 0
        %v603 = vsel %vm592, %v443, 0
        %v606 = vsel %vm592, %v444, 0
        %v609 = vsel %vm592, %v445, 0
        %v612 = vsel %vm592, %v446, 0
        %v615 = vsel %vm592, %v447, 0
        %617 = vmatpush.msra.mxu0 0.0
        %618 = vmatpush.msra.mxu0 0.0
        %619 = vmatpush.msra.mxu0 0.0
        %620 = vmatpush.msra.mxu0 0.0
        %621 = vmatpush.msra.mxu0 %v542
        %622 = vmatpush.msra.mxu0 %v540
        %623 = vmatpush.msra.mxu0 %v538
        %624 = vmatpush.msra.mxu0 %v536
        %625 = vmatpush.msra.mxu0 %v438
        %626 = vmatpush.msra.mxu0 %v436
        %627 = vmatpush.msra.mxu0 %v434
        %628 = vmatpush.msra.mxu0 %v432
        %629 = vmatpush.msra.mxu0 %v498
        %630 = vmatpush.msra.mxu0 %v496
        %631 = vmatpush.msra.mxu0 %v494
        %632 = vmatpush.msra.mxu0 %v492
        %633 = vmatmul.f32.gmra.mxu0 %v594
        %v634 = vpop.f32.mrf.mxu0
        %v635 = vadd.f32 %v555, %v634
        %636 = vmatmul.f32.gmra.mxu0 %v597
        %v637 = vpop.f32.mrf.mxu0
        %v638 = vadd.f32 %v560, %v637
        %639 = vmatmul.f32.gmra.mxu0 %v600
        %v640 = vpop.f32.mrf.mxu0
        %v641 = vadd.f32 %v565, %v640
        %642 = vmatmul.f32.gmra.mxu0 %v603
        %v643 = vpop.f32.mrf.mxu0
        %v644 = vadd.f32 %v570, %v643
        %645 = vmatmul.f32.gmra.mxu0 %v606
        %v646 = vpop.f32.mrf.mxu0
        %v647 = vadd.f32 %v575, %v646
        %648 = vmatmul.f32.gmra.mxu0 %v609
        %v649 = vpop.f32.mrf.mxu0
        %v650 = vadd.f32 %v580, %v649
        %651 = vmatmul.f32.gmra.mxu0 %v612
        %v652 = vpop.f32.mrf.mxu0
        %v653 = vadd.f32 %v585, %v652
        %654 = vmatmul.f32.gmra.mxu0 %v615
        %v655 = vpop.f32.mrf.mxu0
        %v656 = vadd.f32 %v590, %v655
        %657 = vdwg.mxu0
        %658 = vmatpush.msra.mxu0 0.0
        %659 = vmatpush.msra.mxu0 0.0
        %660 = vmatpush.msra.mxu0 0.0
        %661 = vmatpush.msra.mxu0 0.0
        %662 = vmatpush.msra.mxu0 %v543
        %663 = vmatpush.msra.mxu0 %v541
        %664 = vmatpush.msra.mxu0 %v539
        %665 = vmatpush.msra.mxu0 %v537
        %666 = vmatpush.msra.mxu0 %v439
        %667 = vmatpush.msra.mxu0 %v437
        %668 = vmatpush.msra.mxu0 %v435
        %669 = vmatpush.msra.mxu0 %v433
        %670 = vmatpush.msra.mxu0 %v499
        %671 = vmatpush.msra.mxu0 %v497
        %672 = vmatpush.msra.mxu0 %v495
        %673 = vmatpush.msra.mxu0 %v493
        %674 = vmatmul.f32.gmra.mxu0 %v594
        %v675 = vpop.f32.mrf.mxu0
        %v676 = vadd.f32 %v555, %v675
        %677 = vmatmul.f32.gmra.mxu0 %v597
        %v678 = vpop.f32.mrf.mxu0
        %v679 = vadd.f32 %v560, %v678
        %680 = vmatmul.f32.gmra.mxu0 %v600
        %v681 = vpop.f32.mrf.mxu0
        %v682 = vadd.f32 %v565, %v681
        %683 = vmatmul.f32.gmra.mxu0 %v603
        %v684 = vpop.f32.mrf.mxu0
        %v685 = vadd.f32 %v570, %v684
        %686 = vmatmul.f32.gmra.mxu0 %v606
        %v687 = vpop.f32.mrf.mxu0
        %v688 = vadd.f32 %v575, %v687
        %689 = vmatmul.f32.gmra.mxu0 %v609
        %v690 = vpop.f32.mrf.mxu0
        %v691 = vadd.f32 %v580, %v690
        %692 = vmatmul.f32.gmra.mxu0 %v612
        %v693 = vpop.f32.mrf.mxu0
        %v694 = vadd.f32 %v585, %v693
        %695 = vmatmul.f32.gmra.mxu0 %v615
        %v696 = vpop.f32.mrf.mxu0
        %v697 = vadd.f32 %v590, %v696
        %698 = vdwg.mxu0
        %vm699 = vcmp.gt.f32.partialorder %v635, 0.0
        %vm700 = vcmp.gt.f32.partialorder %v676, 0.0
        %vm701 = vcmp.gt.f32.partialorder %v638, 0.0
        %vm702 = vcmp.gt.f32.partialorder %v679, 0.0
        %vm703 = vcmp.gt.f32.partialorder %v641, 0.0
        %vm704 = vcmp.gt.f32.partialorder %v682, 0.0
        %vm705 = vcmp.gt.f32.partialorder %v644, 0.0
        %vm706 = vcmp.gt.f32.partialorder %v685, 0.0
        %vm707 = vcmp.gt.f32.partialorder %v647, 0.0
        %vm708 = vcmp.gt.f32.partialorder %v688, 0.0
        %vm709 = vcmp.gt.f32.partialorder %v650, 0.0
        %vm710 = vcmp.gt.f32.partialorder %v691, 0.0
        %vm711 = vcmp.gt.f32.partialorder %v653, 0.0
        %vm712 = vcmp.gt.f32.partialorder %v694, 0.0
        %vm713 = vcmp.gt.f32.partialorder %v656, 0.0
        %vm714 = vcmp.gt.f32.partialorder %v697, 0.0
        %v715 = vmul.f32 %v635, 0.01
        %v716 = vmul.f32 %v676, 0.01
        %v717 = vmul.f32 %v638, 0.01
        %v718 = vmul.f32 %v679, 0.01
        %v719 = vmul.f32 %v641, 0.01
        %v720 = vmul.f32 %v682, 0.01
        %v721 = vmul.f32 %v644, 0.01
        %v722 = vmul.f32 %v685, 0.01
        %v723 = vmul.f32 %v647, 0.01
        %v724 = vmul.f32 %v688, 0.01
        %v725 = vmul.f32 %v650, 0.01
        %v726 = vmul.f32 %v691, 0.01
        %v727 = vmul.f32 %v653, 0.01
        %v728 = vmul.f32 %v694, 0.01
        %v729 = vmul.f32 %v656, 0.01
        %v730 = vmul.f32 %v697, 0.01
        %v731 = vsel %vm699, %v635, %v715
        %v732 = vsel %vm700, %v676, %v716
        %v733 = vsel %vm701, %v638, %v717
        %v734 = vsel %vm702, %v679, %v718
        %v735 = vsel %vm703, %v641, %v719
        %v736 = vsel %vm704, %v682, %v720
        %v737 = vsel %vm705, %v644, %v721
        %v738 = vsel %vm706, %v685, %v722
        %v739 = vsel %vm707, %v647, %v723
        %v740 = vsel %vm708, %v688, %v724
        %v741 = vsel %vm709, %v650, %v725
        %v742 = vsel %vm710, %v691, %v726
        %v743 = vsel %vm711, %v653, %v727
        %v744 = vsel %vm712, %v694, %v728
        %v745 = vsel %vm713, %v656, %v729
        %v746 = vsel %vm714, %v697, %v730
        %v747 = vpack.c.bf16 %v732, %v731
        %v748 = vpack.c.bf16 %v734, %v733
        %v749 = vpack.c.bf16 %v736, %v735
        %v750 = vpack.c.bf16 %v738, %v737
        %v751 = vpack.c.bf16 %v740, %v739
        %v752 = vpack.c.bf16 %v742, %v741
        %v753 = vpack.c.bf16 %v744, %v743
        %v754 = vpack.c.bf16 %v746, %v745
        %755 = vst [vmem:[%s260] sm:$0xff] %v747
        %756 = vst [vmem:[%s260 + $0x8] sm:$0xff] %v748
        %757 = vst [vmem:[%s260 + $0x10] sm:$0xff] %v749
        %758 = vst [vmem:[%s260 + $0x18] sm:$0xff] %v750
        %759 = vst [vmem:[%s260 + $0x20] sm:$0xff] %v751
        %760 = vst [vmem:[%s260 + $0x28] sm:$0xff] %v752
        %761 = vst [vmem:[%s260 + $0x30] sm:$0xff] %v753
        %762 = vst [vmem:[%s260 + $0x38] sm:$0xff] %v754
        %p763 = scmp.lt.s32.totalorder %s20, 1
        %s764 = scalar_select %p763, %s20, 1
        %s765 = smul.addr %s764, 16
        %s766 = smul.addr %s765, 4
        %s767 = scalar_lea.vmem %s5, %s766
        // Predicated region
        $region49: #{cnn_forward.2} parent=39 // pred_check
          %p768 = pneg %p148
        $region50: #{cnn_forward.2} parent=39 // pred_check_branch
          %770 = sbr.rel (%p768) target = $region52
        $region51: #{cnn_forward.2} parent=39 // pred_region
          _
        $region52: #{cnn_forward.2} parent=39 // pred_fallthru
          _
      $region40: #{cnn_forward.2} parent=5 // pred_fallthru
        _
      %p771 = scmp.le.s32.totalorder 2, %s15
      // Predicated region
      $region53: #{cnn_forward.2} parent=5 // pred_check
        %p772 = pneg %p771
      $region54: #{cnn_forward.2} parent=5 // pred_check_branch
        %774 = sbr.rel (%p772) target = $region56
      $region55: #{cnn_forward.2} parent=5 // pred_region
        %s775 = ssub.s32 %s15, 2
        // Predicated region
        $region57: #{cnn_forward.2} parent=55 // pred_check
          %p776 = pneg %p154
        $region58: #{cnn_forward.2} parent=55 // pred_check_branch
          %778 = sbr.rel (%p776) target = $region60
        $region59: #{cnn_forward.2} parent=55 // pred_region
          %p779 = scmp.lt.s32.totalorder %s21, 1
          %s780 = scalar_select %p779, %s21, 1
          %s781 = smul.addr %s780, 16
          %s782 = smul.addr %s781, 4
          %s783 = scalar_lea.vmem %s5, %s782
        $region60: #{cnn_forward.2} parent=55 // pred_fallthru
          _
      $region56: #{cnn_forward.2} parent=5 // pred_fallthru
        _
    $region6: #{cnn_forward.2} parent=1 // loop_footer
      %s19 = sadd.s32 1, %s15
    $region7: #{cnn_forward.2} parent=1 // loop_footer_branch
      %14 = sbr.rel target = $region3
    $region8: #{cnn_forward.2} parent=1 // loop_exit
      _
    %784 = vsyncpa [#allocation3], 1
    %s785 = scalar_lea.sflag [#allocation3], 1
    %786 = vsyncpa %s785, 1
    %787 = vsyncpa [#allocation5], 1

// kernel: cnn_forward.3
$region0: #{cnn_forward.3}
  #allocation0 [shape = 'u32[]', space=smem, size = 0x4, offset = 0x4, fixed_abs, tag = 'smem constant byte address 0x4 - core index']
  #allocation1 [shape = 'u32[72,128]{1,0:T(1,128)}', space=vmem, size = 0x9000, scoped, tag = 'internal scratch']
  #allocation2 [shape = 'f32[2,128]{1,0:T(2,128)}', space=vmem, size = 0x400, scoped, tag = 'scratch operand']
  %s0 = inlined_call_operand.vmem [shape: bf16[64,2,256], index: 0, kind: input, shape index: {}]
  %s1 = inlined_call_operand.hbm [shape: bf16[64,256,128], index: 1, kind: input, shape index: {}]
  %s2 = inlined_call_operand.vmem [shape: f32[2,2,128], index: 2, kind: output, shape index: {}]
  %s3 = sld [smem:[#allocation0]]
  $region53: #{cnn_forward.3} parent=0
    _
  %s5 = ssub.s32 1, %s3
  %s6 = scalar_select 0, %s5, %s3
  $region1: #{cnn_forward.3} parent=0
    #allocation3 [shape = 'u8[524288]{0}', space=vmem, size = 0x80000, scoped, tag = 'input window, operand 1']
    #allocation4 [shape = 's32[2]{0}', space=sflag, size = 0x8, scoped, tag = 'scoped memory for cnn_forward.3']
    %7 = vsyncpa [#allocation4], 0
    %s8 = scalar_lea.sflag [#allocation4], 1
    %9 = vsyncpa %s8, 0
    loop: start=0, step=1, limit=18
    $region2: #{cnn_forward.3} parent=1 // loop_pre_header
      _
    $region3: #{cnn_forward.3} parent=1 // loop_header
      %s11 = sphi 0, %s15
      %p12 = scmp.ge.s32.totalorder %s11, 18
      %s18 = sphi 0, %s30
      %s19 = sphi 0, %s26
      %s20 = sphi 0, %s18
      %s21 = sphi 0, %s19
      %s22 = sphi 0, %s20
      %s23 = sphi 0, %s21
      %s37 = sphi 0, %s39
      %s40 = sphi 0, %s37
      %s41 = sphi 0, %s40
      %s57 = sphi 0, %s41
      %s67 = sphi 0, %s69
      %s70 = sphi 0, %s67
      %s71 = sphi 0, %s70
      %s87 = sphi 0, %s71
      %s93 = sphi 0, %s95
      %s96 = sphi 0, %s93
      %s97 = sphi 0, %s96
      %s113 = sphi 0, %s97
    $region4: #{cnn_forward.3} parent=1 // loop_header_branch
      %14 = sbr.rel (%p12) target = $region8
    $region5: #{cnn_forward.3} parent=1 // loop_body
      %s16 = ssub.s32 %s11, 1
      %s17 = ssub.s32 %s11, 2
      %s24 = sadd.s32 1, %s19
      %p25 = scmp.ge.s32.totalorder %s24, 8
      %s26 = scalar_select %p25, 0, %s24
      %s27 = sadd.s32 1, %s18
      %s28 = scalar_select %p25, %s27, %s18
      %p29 = scmp.ge.s32.totalorder %s28, 2
      %s30 = scalar_select %p29, 0, %s28
      %s31 = smul.u32 %s18, 8
      %s32 = sadd.s32 %s31, %s19
      %s33 = smul.u32 %s30, 8
      %s34 = sadd.s32 %s33, %s26
      %s35 = ssub.s32 %s32, %s34
      %p36 = scmp.eq.s32.totalorder %s35, 0
      %s38 = sadd.s32 %s37, 1
      %s39 = scalar_select %p36, %s37, %s38
      %p42 = pneg %p36
      %p43 = scmp.eq.s32.totalorder %s11, 15
      %p44 = por %p42, %p43
      %p45 = scmp.ne.s32.totalorder %s37, %s40
      %p46 = scmp.eq.s32.totalorder %s11, 0
      %p47 = por %p45, %p46
      %p48 = scmp.ne.s32.totalorder %s37, %s40
      %p49 = scmp.eq.s32.totalorder %s16, 15
      %p50 = por %p48, %p49
      %p51 = scmp.ne.s32.totalorder %s40, %s41
      %p52 = scmp.eq.s32.totalorder %s16, 0
      %p53 = por %p51, %p52
      %p54 = scmp.ne.s32.totalorder %s40, %s41
      %p55 = scmp.eq.s32.totalorder %s17, 15
      %p56 = por %p54, %p55
      %p58 = scmp.ne.s32.totalorder %s41, %s57
      %p59 = scmp.eq.s32.totalorder %s17, 0
      %p60 = por %p58, %p59
      %s61 = smul.u32 %s18, 8
      %s62 = sadd.s32 %s61, %s19
      %s63 = smul.u32 %s30, 8
      %s64 = sadd.s32 %s63, %s26
      %s65 = ssub.s32 %s62, %s64
      %p66 = scmp.eq.s32.totalorder %s65, 0
      %s68 = sadd.s32 %s67, 1
      %s69 = scalar_select %p66, %s67, %s68
      %p72 = pneg %p66
      %p73 = scmp.eq.s32.totalorder %s11, 15
      %p74 = por %p72, %p73
      %p75 = scmp.ne.s32.totalorder %s67, %s70
      %p76 = scmp.eq.s32.totalorder %s11, 0
      %p77 = por %p75, %p76
      %p78 = scmp.ne.s32.totalorder %s67, %s70
      %p79 = scmp.eq.s32.totalorder %s16, 15
      %p80 = por %p78, %p79
      %p81 = scmp.ne.s32.totalorder %s70, %s71
      %p82 = scmp.eq.s32.totalorder %s16, 0
      %p83 = por %p81, %p82
      %p84 = scmp.ne.s32.totalorder %s70, %s71
      %p85 = scmp.eq.s32.totalorder %s17, 15
      %p86 = por %p84, %p85
      %p88 = scmp.ne.s32.totalorder %s71, %s87
      %p89 = scmp.eq.s32.totalorder %s17, 0
      %p90 = por %p88, %p89
      %s91 = ssub.s32 %s18, %s30
      %p92 = scmp.eq.s32.totalorder %s91, 0
      %s94 = sadd.s32 %s93, 1
      %s95 = scalar_select %p92, %s93, %s94
      %p98 = pneg %p92
      %p99 = scmp.eq.s32.totalorder %s11, 15
      %p100 = por %p98, %p99
      %p101 = scmp.ne.s32.totalorder %s93, %s96
      %p102 = scmp.eq.s32.totalorder %s11, 0
      %p103 = por %p101, %p102
      %p104 = scmp.ne.s32.totalorder %s93, %s96
      %p105 = scmp.eq.s32.totalorder %s16, 15
      %p106 = por %p104, %p105
      %p107 = scmp.ne.s32.totalorder %s96, %s97
      %p108 = scmp.eq.s32.totalorder %s16, 0
      %p109 = por %p107, %p108
      %p110 = scmp.ne.s32.totalorder %s96, %s97
      %p111 = scmp.eq.s32.totalorder %s17, 15
      %p112 = por %p110, %p111
      %p114 = scmp.ne.s32.totalorder %s97, %s113
      %p115 = scmp.eq.s32.totalorder %s17, 0
      %p116 = por %p114, %p115
      %p117 = scmp.le.s32.totalorder 1, %s11
      %p118 = scmp.lt.s32.totalorder %s11, 17
      %p119 = pnand %p117, %p118
      %p120 = pneg %p119
      // Predicated region
      $region9: #{cnn_forward.3} parent=5 // pred_check
        _
      $region10: #{cnn_forward.3} parent=5 // pred_check_branch
        %122 = sbr.rel (%p119) target = $region12
      $region11: #{cnn_forward.3} parent=5 // pred_region
        %s123 = ssub.s32 %s11, 1
      $region12: #{cnn_forward.3} parent=5 // pred_fallthru
        _
      %p124 = scmp.lt.s32.totalorder %s11, 16
      // Predicated region
      $region13: #{cnn_forward.3} parent=5 // pred_check
        %p125 = pneg %p124
      $region14: #{cnn_forward.3} parent=5 // pred_check_branch
        %127 = sbr.rel (%p125) target = $region16
      $region15: #{cnn_forward.3} parent=5 // pred_region
        // Predicated region
        $region17: #{cnn_forward.3} parent=15 // pred_check
          %p128 = pneg %p47
        $region18: #{cnn_forward.3} parent=15 // pred_check_branch
          %130 = sbr.rel (%p128) target = $region20
        $region19: #{cnn_forward.3} parent=15 // pred_region
          %s131 = smul.u32 %s18, 8
          %s132 = sadd.s32 %s131, %s19
          %s133 = smul.u32 4, %s132
          %p134 = scmp.lt.s32.totalorder %s133, 63
          %s135 = scalar_select %p134, %s133, 63
          %s136 = smul.addr %s135, 2
          %s137 = scalar_lea.vmem %s0, %s136
          %s138 = smul.u32 %s18, 8
          %s139 = sadd.s32 %s138, %s19
          %s140 = smul.u32 4, %s139
        $region20: #{cnn_forward.3} parent=15 // pred_fallthru
          _
        // Predicated region
        $region21: #{cnn_forward.3} parent=15 // pred_check
          %p141 = pneg %p77
        $region22: #{cnn_forward.3} parent=15 // pred_check_branch
          %143 = sbr.rel (%p141) target = $region24
        $region23: #{cnn_forward.3} parent=15 // pred_region
          %s144 = sand.u32 %s67, 1
          %s145 = scalar_lea.sflag [#allocation4], %s144
          %s146 = sand.u32 %s67, 1
          %s147 = smul.addr %s146, 512
          %s148 = scalar_lea.vmem [#allocation3], %s147
          %s149 = smul.u32 %s18, 8
          %s150 = sadd.s32 %s149, %s19
          %s151 = smul.u32 4, %s150
          %153 = vsyncadd %s145, 0
          %s154 = smul.addr %s151, 32
          %s155 = smul.addr %s154, 4
          %s156 = scalar_lea.hbm %s1, %s155
          %s157 = sshll.u32 %s156, 4
          %s158 = int_to_ptr.hbm [resolvable:$true] %s157
          %s159 = sshll.u32 %s148, 4
          %s160 = int_to_ptr.vmem [resolvable:$true] %s159
          %165 = dma.hbm_to_vmem [thread:$0]  %s158, 8192, %s160, %s145, 64, 64, 4
        $region24: #{cnn_forward.3} parent=15 // pred_fallthru
          _
      $region16: #{cnn_forward.3} parent=5 // pred_fallthru
        _
      %p166 = scmp.le.s32.totalorder 1, %s11
      %p167 = scmp.lt.s32.totalorder %s11, 17
      %p168 = pnand %p166, %p167
      %p169 = pneg %p168
      // Predicated region
      $region25: #{cnn_forward.3} parent=5 // pred_check
        _
      $region26: #{cnn_forward.3} parent=5 // pred_check_branch
        %171 = sbr.rel (%p168) target = $region28
      $region27: #{cnn_forward.3} parent=5 // pred_region
        %s172 = ssub.s32 %s11, 1
        %s173 = sand.u32 %s70, 1
        %s174 = scalar_lea.sflag [#allocation4], %s173
        %s175 = sand.u32 %s70, 1
        %s176 = smul.addr %s175, 512
        %s177 = scalar_lea.vmem [#allocation3], %s176
        // Predicated region
        $region29: #{cnn_forward.3} parent=27 // pred_check
          %p178 = pneg %p83
        $region30: #{cnn_forward.3} parent=27 // pred_check_branch
          %180 = sbr.rel (%p178) target = $region32
        $region31: #{cnn_forward.3} parent=27 // pred_region
          %182 = dma.done %s174, 8192
        $region32: #{cnn_forward.3} parent=27 // pred_fallthru
          _
        %s183 = smul.u32 %s20, 8
        %s184 = sadd.s32 %s183, %s21
        %s185 = smul.u32 4, %s184
        %p186 = scmp.lt.s32.totalorder %s185, 63
        %s187 = scalar_select %p186, %s185, 63
        %s188 = smul.addr %s187, 2
        %s189 = scalar_lea.vmem %s0, %s188
        %p190 = pneg %p53
        %p191 = pneg %p50
        %s192 = sand.u32 %s70, 1
        %s193 = scalar_lea.sflag [#allocation4], %s192
        %s194 = sand.u32 %s70, 1
        %s195 = smul.addr %s194, 512
        %s196 = scalar_lea.vmem [#allocation3], %s195
        %p197 = pneg %p83
        %p198 = pneg %p80
        %p199 = pneg %p109
        %p200 = pneg %p106
        %p201 = scmp.lt.s32.totalorder %s20, 1
        %s202 = scalar_select %p201, %s20, 1
        %s203 = smul.addr %s202, 2
        %s204 = scalar_lea.vmem %s2, %s203
        %s205 = smul.u32 %s20, 8
        %s206 = sadd.s32 %s205, %s21
        %s207 = smul.u32 4, %s206
        %p208 = scmp.lt.s32.totalorder %s207, 63
        %s209 = scalar_select %p208, %s207, 63
        %s210 = smul.addr %s209, 2
        %s211 = scalar_lea.vmem %s0, %s210
        %s212 = smul.u32 %s20, 8
        %s213 = sadd.s32 %s212, %s21
        %s214 = smul.u32 4, %s213
        %s215 = smul.u32 %s20, 8
        %s216 = sadd.s32 %s215, %s21
        %s217 = smul.u32 4, %s216
        %p218 = scmp.lt.s32.totalorder %s20, 1
        %s219 = scalar_select %p218, %s20, 1
        %s220 = smul.addr %s219, 2
        %s221 = scalar_lea.vmem %s2, %s220
        %p222 = scmp.eq.s32.totalorder %s21, 0
        // Predicated region
        $region33: #{cnn_forward.3} parent=27 // pred_check
          %p223 = pneg %p222
        $region34: #{cnn_forward.3} parent=27 // pred_check_branch
          %225 = sbr.rel (%p223) target = $region36
        $region35: #{cnn_forward.3} parent=27 // pred_region
          %226 = vst [vmem:[#allocation2] sm:$0x3] 0.0
        $region36: #{cnn_forward.3} parent=27 // pred_fallthru
          _
        %v227 = vld [vmem:[%s211] sm:$0x3]
        %v228 = vld [vmem:[%s177] sm:$0xf]
        %v229 = vld [vmem:[%s177 + $0x4] sm:$0xf]
        %v230 = vld [vmem:[%s177 + $0x8] sm:$0xf]
        %v231 = vld [vmem:[%s177 + $0xc] sm:$0xf]
        %v232 = vld [vmem:[%s177 + $0x10] sm:$0xf]
        %v233 = vld [vmem:[%s177 + $0x14] sm:$0xf]
        %v234 = vld [vmem:[%s177 + $0x18] sm:$0xf]
        %v235 = vld [vmem:[%s177 + $0x1c] sm:$0xf]
        %v236 = vld [vmem:[%s177 + $0x20] sm:$0xf]
        %v237 = vld [vmem:[%s177 + $0x24] sm:$0xf]
        %v238 = vld [vmem:[%s177 + $0x28] sm:$0xf]
        %v239 = vld [vmem:[%s177 + $0x2c] sm:$0xf]
        %v240 = vld [vmem:[%s177 + $0x30] sm:$0xf]
        %v241 = vld [vmem:[%s177 + $0x34] sm:$0xf]
        %v242 = vld [vmem:[%s177 + $0x38] sm:$0xf]
        %v243 = vld [vmem:[%s177 + $0x3c] sm:$0xf]
        %v244 = vld [vmem:[%s177 + $0x40] sm:$0xf]
        %v245 = vld [vmem:[%s177 + $0x44] sm:$0xf]
        %v246 = vld [vmem:[%s177 + $0x48] sm:$0xf]
        %v247 = vld [vmem:[%s177 + $0x4c] sm:$0xf]
        %v248 = vld [vmem:[%s177 + $0x50] sm:$0xf]
        %v249 = vld [vmem:[%s177 + $0x54] sm:$0xf]
        %v250 = vld [vmem:[%s177 + $0x58] sm:$0xf]
        %v251 = vld [vmem:[%s177 + $0x5c] sm:$0xf]
        %v252 = vld [vmem:[%s177 + $0x60] sm:$0xf]
        %v253 = vld [vmem:[%s177 + $0x64] sm:$0xf]
        %v254 = vld [vmem:[%s177 + $0x68] sm:$0xf]
        %v255 = vld [vmem:[%s177 + $0x6c] sm:$0xf]
        %v256 = vld [vmem:[%s177 + $0x70] sm:$0xf]
        %v257 = vld [vmem:[%s177 + $0x74] sm:$0xf]
        %v258 = vld [vmem:[%s177 + $0x78] sm:$0xf]
        %v259 = vld [vmem:[%s177 + $0x7c] sm:$0xf]
        %s260 = scalar_lea.vmem %s211, 2
        %v261 = vld [vmem:[%s260] sm:$0x3]
        %s262 = scalar_lea.vmem %s177, 128 [#allocation3]
        %v263 = vld [vmem:[%s262] sm:$0xf]
        %v264 = vld [vmem:[%s262 + $0x4] sm:$0xf]
        %v265 = vld [vmem:[%s262 + $0x8] sm:$0xf]
        %v266 = vld [vmem:[%s262 + $0xc] sm:$0xf]
        %v267 = vld [vmem:[%s262 + $0x10] sm:$0xf]
        %v268 = vld [vmem:[%s262 + $0x14] sm:$0xf]
        %v269 = vld [vmem:[%s262 + $0x18] sm:$0xf]
        %v270 = vld [vmem:[%s262 + $0x1c] sm:$0xf]
        %v271 = vld [vmem:[%s262 + $0x20] sm:$0xf]
        %v272 = vld [vmem:[%s262 + $0x24] sm:$0xf]
        %v273 = vld [vmem:[%s262 + $0x28] sm:$0xf]
        %v274 = vld [vmem:[%s262 + $0x2c] sm:$0xf]
        %v275 = vld [vmem:[%s262 + $0x30] sm:$0xf]
        %v276 = vld [vmem:[%s262 + $0x34] sm:$0xf]
        %v277 = vld [vmem:[%s262 + $0x38] sm:$0xf]
        %v278 = vld [vmem:[%s262 + $0x3c] sm:$0xf]
        %v279 = vld [vmem:[%s262 + $0x40] sm:$0xf]
        %v280 = vld [vmem:[%s262 + $0x44] sm:$0xf]
        %v281 = vld [vmem:[%s262 + $0x48] sm:$0xf]
        %v282 = vld [vmem:[%s262 + $0x4c] sm:$0xf]
        %v283 = vld [vmem:[%s262 + $0x50] sm:$0xf]
        %v284 = vld [vmem:[%s262 + $0x54] sm:$0xf]
        %v285 = vld [vmem:[%s262 + $0x58] sm:$0xf]
        %v286 = vld [vmem:[%s262 + $0x5c] sm:$0xf]
        %v287 = vld [vmem:[%s262 + $0x60] sm:$0xf]
        %v288 = vld [vmem:[%s262 + $0x64] sm:$0xf]
        %v289 = vld [vmem:[%s262 + $0x68] sm:$0xf]
        %v290 = vld [vmem:[%s262 + $0x6c] sm:$0xf]
        %v291 = vld [vmem:[%s262 + $0x70] sm:$0xf]
        %v292 = vld [vmem:[%s262 + $0x74] sm:$0xf]
        %v293 = vld [vmem:[%s262 + $0x78] sm:$0xf]
        %v294 = vld [vmem:[%s262 + $0x7c] sm:$0xf]
        %296 = vst [vmem:[#allocation1] ss:$9 sm:$0xff] %v261
        %v297 = vld [vmem:[#allocation1] sm:$0xff]
        %v298 = vld [vmem:[#allocation1 + $0x9] sm:$0xff]
        %v333 = vunpack.c.l.b16 %v263
        %v334 = vunpack.c.l.b16 %v264
        %v335 = vunpack.c.l.b16 %v265
        %v336 = vunpack.c.l.b16 %v266
        %v337 = vunpack.c.l.b16 %v267
        %v338 = vunpack.c.l.b16 %v268
        %v339 = vunpack.c.l.b16 %v269
        %v340 = vunpack.c.l.b16 %v270
        %v341 = vunpack.c.l.b16 %v271
        %v342 = vunpack.c.l.b16 %v272
        %v343 = vunpack.c.l.b16 %v273
        %v344 = vunpack.c.l.b16 %v274
        %v345 = vunpack.c.l.b16 %v275
        %v346 = vunpack.c.l.b16 %v276
        %v347 = vunpack.c.l.b16 %v277
        %v348 = vunpack.c.l.b16 %v278
        %v349 = vunpack.c.l.b16 %v279
        %v350 = vunpack.c.l.b16 %v280
        %v351 = vunpack.c.l.b16 %v281
        %v352 = vunpack.c.l.b16 %v282
        %v353 = vunpack.c.l.b16 %v283
        %v354 = vunpack.c.l.b16 %v284
        %v355 = vunpack.c.l.b16 %v285
        %v356 = vunpack.c.l.b16 %v286
        %v357 = vunpack.c.l.b16 %v287
        %v358 = vunpack.c.l.b16 %v288
        %v359 = vunpack.c.l.b16 %v289
        %v360 = vunpack.c.l.b16 %v290
        %v361 = vunpack.c.l.b16 %v291
        %v362 = vunpack.c.l.b16 %v292
        %v363 = vunpack.c.l.b16 %v293
        %v364 = vunpack.c.l.b16 %v294
        %v365 = vpack.c.b16 %v334, %v333
        %v366 = vpack.c.b16 %v336, %v335
        %v367 = vpack.c.b16 %v338, %v337
        %v368 = vpack.c.b16 %v340, %v339
        %v369 = vpack.c.b16 %v342, %v341
        %v370 = vpack.c.b16 %v344, %v343
        %v371 = vpack.c.b16 %v346, %v345
        %v372 = vpack.c.b16 %v348, %v347
        %v373 = vpack.c.b16 %v350, %v349
        %v374 = vpack.c.b16 %v352, %v351
        %v375 = vpack.c.b16 %v354, %v353
        %v376 = vpack.c.b16 %v356, %v355
        %v377 = vpack.c.b16 %v358, %v357
        %v378 = vpack.c.b16 %v360, %v359
        %v379 = vpack.c.b16 %v362, %v361
        %v380 = vpack.c.b16 %v364, %v363
        %397 = vmatpush.bf16.msra.mxu0 %v372
        %398 = vmatpush.bf16.msra.mxu0 %v371
        %399 = vmatpush.bf16.msra.mxu0 %v370
        %400 = vmatpush.bf16.msra.mxu0 %v369
        %401 = vmatpush.bf16.msra.mxu0 %v368
        %402 = vmatpush.bf16.msra.mxu0 %v367
        %403 = vmatpush.bf16.msra.mxu0 %v366
        %404 = vmatpush.bf16.msra.mxu0 %v365
        %405 = vmatmul.bf16.gmra.mxu0 %v297
        %v406 = vpop.f32.mrf.mxu0
        %v407 = vadd.f32 0.0, %v406
        %v408 = vpop.f32.mrf.mxu0
        %409 = vdwg.mxu0
        %410 = vmatpush.bf16.msra.mxu0 %v380
        %411 = vmatpush.bf16.msra.mxu0 %v379
        %412 = vmatpush.bf16.msra.mxu0 %v378
        %413 = vmatpush.bf16.msra.mxu0 %v377
        %414 = vmatpush.bf16.msra.mxu0 %v376
        %415 = vmatpush.bf16.msra.mxu0 %v375
        %416 = vmatpush.bf16.msra.mxu0 %v374
        %417 = vmatpush.bf16.msra.mxu0 %v373
        %418 = vmatmul.bf16.gmra.mxu0 %v298
        %v419 = vpop.f32.mrf.mxu0
        %v420 = vadd.f32 %v407, %v419
        %v421 = vpop.f32.mrf.mxu0
        %422 = vdwg.mxu0
        %424 = vst [vmem:[#allocation1] ss:$9 sm:$0xff] %v227
        %v425 = vld [vmem:[#allocation1] sm:$0xff]
        %v426 = vld [vmem:[#allocation1 + $0x9] sm:$0xff]
        %v461 = vunpack.c.l.b16 %v228
        %v462 = vunpack.c.l.b16 %v229
        %v463 = vunpack.c.l.b16 %v230
        %v464 = vunpack.c.l.b16 %v231
        %v465 = vunpack.c.l.b16 %v232
        %v466 = vunpack.c.l.b16 %v233
        %v467 = vunpack.c.l.b16 %v234
        %v468 = vunpack.c.l.b16 %v235
        %v469 = vunpack.c.l.b16 %v236
        %v470 = vunpack.c.l.b16 %v237
        %v471 = vunpack.c.l.b16 %v238
        %v472 = vunpack.c.l.b16 %v239
        %v473 = vunpack.c.l.b16 %v240
        %v474 = vunpack.c.l.b16 %v241
        %v475 = vunpack.c.l.b16 %v242
        %v476 = vunpack.c.l.b16 %v243
        %v477 = vunpack.c.l.b16 %v244
        %v478 = vunpack.c.l.b16 %v245
        %v479 = vunpack.c.l.b16 %v246
        %v480 = vunpack.c.l.b16 %v247
        %v481 = vunpack.c.l.b16 %v248
        %v482 = vunpack.c.l.b16 %v249
        %v483 = vunpack.c.l.b16 %v250
        %v484 = vunpack.c.l.b16 %v251
        %v485 = vunpack.c.l.b16 %v252
        %v486 = vunpack.c.l.b16 %v253
        %v487 = vunpack.c.l.b16 %v254
        %v488 = vunpack.c.l.b16 %v255
        %v489 = vunpack.c.l.b16 %v256
        %v490 = vunpack.c.l.b16 %v257
        %v491 = vunpack.c.l.b16 %v258
        %v492 = vunpack.c.l.b16 %v259
        %v493 = vpack.c.b16 %v462, %v461
        %v494 = vpack.c.b16 %v464, %v463
        %v495 = vpack.c.b16 %v466, %v465
        %v496 = vpack.c.b16 %v468, %v467
        %v497 = vpack.c.b16 %v470, %v469
        %v498 = vpack.c.b16 %v472, %v471
        %v499 = vpack.c.b16 %v474, %v473
        %v500 = vpack.c.b16 %v476, %v475
        %v501 = vpack.c.b16 %v478, %v477
        %v502 = vpack.c.b16 %v480, %v479
        %v503 = vpack.c.b16 %v482, %v481
        %v504 = vpack.c.b16 %v484, %v483
        %v505 = vpack.c.b16 %v486, %v485
        %v506 = vpack.c.b16 %v488, %v487
        %v507 = vpack.c.b16 %v490, %v489
        %v508 = vpack.c.b16 %v492, %v491
        %525 = vmatpush.bf16.msra.mxu0 %v500
        %526 = vmatpush.bf16.msra.mxu0 %v499
        %527 = vmatpush.bf16.msra.mxu0 %v498
        %528 = vmatpush.bf16.msra.mxu0 %v497
        %529 = vmatpush.bf16.msra.mxu0 %v496
        %530 = vmatpush.bf16.msra.mxu0 %v495
        %531 = vmatpush.bf16.msra.mxu0 %v494
        %532 = vmatpush.bf16.msra.mxu0 %v493
        %533 = vmatmul.bf16.gmra.mxu0 %v425
        %v534 = vpop.f32.mrf.mxu0
        %v535 = vadd.f32 %v420, %v534
        %v536 = vpop.f32.mrf.mxu0
        %537 = vdwg.mxu0
        %538 = vmatpush.bf16.msra.mxu0 %v508
        %539 = vmatpush.bf16.msra.mxu0 %v507
        %540 = vmatpush.bf16.msra.mxu0 %v506
        %541 = vmatpush.bf16.msra.mxu0 %v505
        %542 = vmatpush.bf16.msra.mxu0 %v504
        %543 = vmatpush.bf16.msra.mxu0 %v503
        %544 = vmatpush.bf16.msra.mxu0 %v502
        %545 = vmatpush.bf16.msra.mxu0 %v501
        %546 = vmatmul.bf16.gmra.mxu0 %v426
        %v547 = vpop.f32.mrf.mxu0
        %v548 = vadd.f32 %v535, %v547
        %v549 = vpop.f32.mrf.mxu0
        %550 = vdwg.mxu0
        %s551 = scalar_lea.vmem %s211, 4
        %v552 = vld [vmem:[%s551] sm:$0x3]
        %s553 = scalar_lea.vmem %s177, 256 [#allocation3]
        %v554 = vld [vmem:[%s553] sm:$0xf]
        %v555 = vld [vmem:[%s553 + $0x4] sm:$0xf]
        %v556 = vld [vmem:[%s553 + $0x8] sm:$0xf]
        %v557 = vld [vmem:[%s553 + $0xc] sm:$0xf]
        %v558 = vld [vmem:[%s553 + $0x10] sm:$0xf]
        %v559 = vld [vmem:[%s553 + $0x14] sm:$0xf]
        %v560 = vld [vmem:[%s553 + $0x18] sm:$0xf]
        %v561 = vld [vmem:[%s553 + $0x1c] sm:$0xf]
        %v562 = vld [vmem:[%s553 + $0x20] sm:$0xf]
        %v563 = vld [vmem:[%s553 + $0x24] sm:$0xf]
        %v564 = vld [vmem:[%s553 + $0x28] sm:$0xf]
        %v565 = vld [vmem:[%s553 + $0x2c] sm:$0xf]
        %v566 = vld [vmem:[%s553 + $0x30] sm:$0xf]
        %v567 = vld [vmem:[%s553 + $0x34] sm:$0xf]
        %v568 = vld [vmem:[%s553 + $0x38] sm:$0xf]
        %v569 = vld [vmem:[%s553 + $0x3c] sm:$0xf]
        %v570 = vld [vmem:[%s553 + $0x40] sm:$0xf]
        %v571 = vld [vmem:[%s553 + $0x44] sm:$0xf]
        %v572 = vld [vmem:[%s553 + $0x48] sm:$0xf]
        %v573 = vld [vmem:[%s553 + $0x4c] sm:$0xf]
        %v574 = vld [vmem:[%s553 + $0x50] sm:$0xf]
        %v575 = vld [vmem:[%s553 + $0x54] sm:$0xf]
        %v576 = vld [vmem:[%s553 + $0x58] sm:$0xf]
        %v577 = vld [vmem:[%s553 + $0x5c] sm:$0xf]
        %v578 = vld [vmem:[%s553 + $0x60] sm:$0xf]
        %v579 = vld [vmem:[%s553 + $0x64] sm:$0xf]
        %v580 = vld [vmem:[%s553 + $0x68] sm:$0xf]
        %v581 = vld [vmem:[%s553 + $0x6c] sm:$0xf]
        %v582 = vld [vmem:[%s553 + $0x70] sm:$0xf]
        %v583 = vld [vmem:[%s553 + $0x74] sm:$0xf]
        %v584 = vld [vmem:[%s553 + $0x78] sm:$0xf]
        %v585 = vld [vmem:[%s553 + $0x7c] sm:$0xf]
        %587 = vst [vmem:[#allocation1] ss:$9 sm:$0xff] %v552
        %v588 = vld [vmem:[#allocation1] sm:$0xff]
        %v589 = vld [vmem:[#allocation1 + $0x9] sm:$0xff]
        %v624 = vunpack.c.l.b16 %v554
        %v625 = vunpack.c.l.b16 %v555
        %v626 = vunpack.c.l.b16 %v556
        %v627 = vunpack.c.l.b16 %v557
        %v628 = vunpack.c.l.b16 %v558
        %v629 = vunpack.c.l.b16 %v559
        %v630 = vunpack.c.l.b16 %v560
        %v631 = vunpack.c.l.b16 %v561
        %v632 = vunpack.c.l.b16 %v562
        %v633 = vunpack.c.l.b16 %v563
        %v634 = vunpack.c.l.b16 %v564
        %v635 = vunpack.c.l.b16 %v565
        %v636 = vunpack.c.l.b16 %v566
        %v637 = vunpack.c.l.b16 %v567
        %v638 = vunpack.c.l.b16 %v568
        %v639 = vunpack.c.l.b16 %v569
        %v640 = vunpack.c.l.b16 %v570
        %v641 = vunpack.c.l.b16 %v571
        %v642 = vunpack.c.l.b16 %v572
        %v643 = vunpack.c.l.b16 %v573
        %v644 = vunpack.c.l.b16 %v574
        %v645 = vunpack.c.l.b16 %v575
        %v646 = vunpack.c.l.b16 %v576
        %v647 = vunpack.c.l.b16 %v577
        %v648 = vunpack.c.l.b16 %v578
        %v649 = vunpack.c.l.b16 %v579
        %v650 = vunpack.c.l.b16 %v580
        %v651 = vunpack.c.l.b16 %v581
        %v652 = vunpack.c.l.b16 %v582
        %v653 = vunpack.c.l.b16 %v583
        %v654 = vunpack.c.l.b16 %v584
        %v655 = vunpack.c.l.b16 %v585
        %v656 = vpack.c.b16 %v625, %v624
        %v657 = vpack.c.b16 %v627, %v626
        %v658 = vpack.c.b16 %v629, %v628
        %v659 = vpack.c.b16 %v631, %v630
        %v660 = vpack.c.b16 %v633, %v632
        %v661 = vpack.c.b16 %v635, %v634
        %v662 = vpack.c.b16 %v637, %v636
        %v663 = vpack.c.b16 %v639, %v638
        %v664 = vpack.c.b16 %v641, %v640
        %v665 = vpack.c.b16 %v643, %v642
        %v666 = vpack.c.b16 %v645, %v644
        %v667 = vpack.c.b16 %v647, %v646
        %v668 = vpack.c.b16 %v649, %v648
        %v669 = vpack.c.b16 %v651, %v650
        %v670 = vpack.c.b16 %v653, %v652
        %v671 = vpack.c.b16 %v655, %v654
        %688 = vmatpush.bf16.msra.mxu0 %v663
        %689 = vmatpush.bf16.msra.mxu0 %v662
        %690 = vmatpush.bf16.msra.mxu0 %v661
        %691 = vmatpush.bf16.msra.mxu0 %v660
        %692 = vmatpush.bf16.msra.mxu0 %v659
        %693 = vmatpush.bf16.msra.mxu0 %v658
        %694 = vmatpush.bf16.msra.mxu0 %v657
        %695 = vmatpush.bf16.msra.mxu0 %v656
        %696 = vmatmul.bf16.gmra.mxu0 %v588
        %v697 = vpop.f32.mrf.mxu0
        %v698 = vadd.f32 0.0, %v697
        %v699 = vpop.f32.mrf.mxu0
        %700 = vdwg.mxu0
        %701 = vmatpush.bf16.msra.mxu0 %v671
        %702 = vmatpush.bf16.msra.mxu0 %v670
        %703 = vmatpush.bf16.msra.mxu0 %v669
        %704 = vmatpush.bf16.msra.mxu0 %v668
        %705 = vmatpush.bf16.msra.mxu0 %v667
        %706 = vmatpush.bf16.msra.mxu0 %v666
        %707 = vmatpush.bf16.msra.mxu0 %v665
        %708 = vmatpush.bf16.msra.mxu0 %v664
        %709 = vmatmul.bf16.gmra.mxu0 %v589
        %v710 = vpop.f32.mrf.mxu0
        %v711 = vadd.f32 %v698, %v710
        %v712 = vpop.f32.mrf.mxu0
        %713 = vdwg.mxu0
        %v714 = vadd.f32 %v548, %v711
        %s715 = scalar_lea.vmem %s211, 6
        %v716 = vld [vmem:[%s715] sm:$0x3]
        %s717 = scalar_lea.vmem %s177, 384 [#allocation3]
        %v718 = vld [vmem:[%s717] sm:$0xf]
        %v719 = vld [vmem:[%s717 + $0x4] sm:$0xf]
        %v720 = vld [vmem:[%s717 + $0x8] sm:$0xf]
        %v721 = vld [vmem:[%s717 + $0xc] sm:$0xf]
        %v722 = vld [vmem:[%s717 + $0x10] sm:$0xf]
        %v723 = vld [vmem:[%s717 + $0x14] sm:$0xf]
        %v724 = vld [vmem:[%s717 + $0x18] sm:$0xf]
        %v725 = vld [vmem:[%s717 + $0x1c] sm:$0xf]
        %v726 = vld [vmem:[%s717 + $0x20] sm:$0xf]
        %v727 = vld [vmem:[%s717 + $0x24] sm:$0xf]
        %v728 = vld [vmem:[%s717 + $0x28] sm:$0xf]
        %v729 = vld [vmem:[%s717 + $0x2c] sm:$0xf]
        %v730 = vld [vmem:[%s717 + $0x30] sm:$0xf]
        %v731 = vld [vmem:[%s717 + $0x34] sm:$0xf]
        %v732 = vld [vmem:[%s717 + $0x38] sm:$0xf]
        %v733 = vld [vmem:[%s717 + $0x3c] sm:$0xf]
        %v734 = vld [vmem:[%s717 + $0x40] sm:$0xf]
        %v735 = vld [vmem:[%s717 + $0x44] sm:$0xf]
        %v736 = vld [vmem:[%s717 + $0x48] sm:$0xf]
        %v737 = vld [vmem:[%s717 + $0x4c] sm:$0xf]
        %v738 = vld [vmem:[%s717 + $0x50] sm:$0xf]
        %v739 = vld [vmem:[%s717 + $0x54] sm:$0xf]
        %v740 = vld [vmem:[%s717 + $0x58] sm:$0xf]
        %v741 = vld [vmem:[%s717 + $0x5c] sm:$0xf]
        %v742 = vld [vmem:[%s717 + $0x60] sm:$0xf]
        %v743 = vld [vmem:[%s717 + $0x64] sm:$0xf]
        %v744 = vld [vmem:[%s717 + $0x68] sm:$0xf]
        %v745 = vld [vmem:[%s717 + $0x6c] sm:$0xf]
        %v746 = vld [vmem:[%s717 + $0x70] sm:$0xf]
        %v747 = vld [vmem:[%s717 + $0x74] sm:$0xf]
        %v748 = vld [vmem:[%s717 + $0x78] sm:$0xf]
        %v749 = vld [vmem:[%s717 + $0x7c] sm:$0xf]
        %751 = vst [vmem:[#allocation1] ss:$9 sm:$0xff] %v716
        %v752 = vld [vmem:[#allocation1] sm:$0xff]
        %v753 = vld [vmem:[#allocation1 + $0x9] sm:$0xff]
        %v788 = vunpack.c.l.b16 %v718
        %v789 = vunpack.c.l.b16 %v719
        %v790 = vunpack.c.l.b16 %v720
        %v791 = vunpack.c.l.b16 %v721
        %v792 = vunpack.c.l.b16 %v722
        %v793 = vunpack.c.l.b16 %v723
        %v794 = vunpack.c.l.b16 %v724
        %v795 = vunpack.c.l.b16 %v725
        %v796 = vunpack.c.l.b16 %v726
        %v797 = vunpack.c.l.b16 %v727
        %v798 = vunpack.c.l.b16 %v728
        %v799 = vunpack.c.l.b16 %v729
        %v800 = vunpack.c.l.b16 %v730
        %v801 = vunpack.c.l.b16 %v731
        %v802 = vunpack.c.l.b16 %v732
        %v803 = vunpack.c.l.b16 %v733
        %v804 = vunpack.c.l.b16 %v734
        %v805 = vunpack.c.l.b16 %v735
        %v806 = vunpack.c.l.b16 %v736
        %v807 = vunpack.c.l.b16 %v737
        %v808 = vunpack.c.l.b16 %v738
        %v809 = vunpack.c.l.b16 %v739
        %v810 = vunpack.c.l.b16 %v740
        %v811 = vunpack.c.l.b16 %v741
        %v812 = vunpack.c.l.b16 %v742
        %v813 = vunpack.c.l.b16 %v743
        %v814 = vunpack.c.l.b16 %v744
        %v815 = vunpack.c.l.b16 %v745
        %v816 = vunpack.c.l.b16 %v746
        %v817 = vunpack.c.l.b16 %v747
        %v818 = vunpack.c.l.b16 %v748
        %v819 = vunpack.c.l.b16 %v749
        %v820 = vpack.c.b16 %v789, %v788
        %v821 = vpack.c.b16 %v791, %v790
        %v822 = vpack.c.b16 %v793, %v792
        %v823 = vpack.c.b16 %v795, %v794
        %v824 = vpack.c.b16 %v797, %v796
        %v825 = vpack.c.b16 %v799, %v798
        %v826 = vpack.c.b16 %v801, %v800
        %v827 = vpack.c.b16 %v803, %v802
        %v828 = vpack.c.b16 %v805, %v804
        %v829 = vpack.c.b16 %v807, %v806
        %v830 = vpack.c.b16 %v809, %v808
        %v831 = vpack.c.b16 %v811, %v810
        %v832 = vpack.c.b16 %v813, %v812
        %v833 = vpack.c.b16 %v815, %v814
        %v834 = vpack.c.b16 %v817, %v816
        %v835 = vpack.c.b16 %v819, %v818
        %852 = vmatpush.bf16.msra.mxu0 %v827
        %853 = vmatpush.bf16.msra.mxu0 %v826
        %854 = vmatpush.bf16.msra.mxu0 %v825
        %855 = vmatpush.bf16.msra.mxu0 %v824
        %856 = vmatpush.bf16.msra.mxu0 %v823
        %857 = vmatpush.bf16.msra.mxu0 %v822
        %858 = vmatpush.bf16.msra.mxu0 %v821
        %859 = vmatpush.bf16.msra.mxu0 %v820
        %860 = vmatmul.bf16.gmra.mxu0 %v752
        %v861 = vpop.f32.mrf.mxu0
        %v862 = vadd.f32 0.0, %v861
        %v863 = vpop.f32.mrf.mxu0
        %864 = vdwg.mxu0
        %865 = vmatpush.bf16.msra.mxu0 %v835
        %866 = vmatpush.bf16.msra.mxu0 %v834
        %867 = vmatpush.bf16.msra.mxu0 %v833
        %868 = vmatpush.bf16.msra.mxu0 %v832
        %869 = vmatpush.bf16.msra.mxu0 %v831
        %870 = vmatpush.bf16.msra.mxu0 %v830
        %871 = vmatpush.bf16.msra.mxu0 %v829
        %872 = vmatpush.bf16.msra.mxu0 %v828
        %873 = vmatmul.bf16.gmra.mxu0 %v753
        %v874 = vpop.f32.mrf.mxu0
        %v875 = vadd.f32 %v862, %v874
        %v876 = vpop.f32.mrf.mxu0
        %877 = vdwg.mxu0
        %v878 = vadd.f32 %v714, %v875
        %v879 = vld [vmem:[#allocation2] sm:$0x3]
        %v880 = vadd.f32 %v879, %v878
        %881 = vst [vmem:[#allocation2] sm:$0x3] %v880
        %p882 = scmp.eq.s32.totalorder %s21, 7
        // Predicated region
        $region37: #{cnn_forward.3} parent=27 // pred_check
          %p883 = pneg %p882
        $region38: #{cnn_forward.3} parent=27 // pred_check_branch
          %885 = sbr.rel (%p883) target = $region40
        $region39: #{cnn_forward.3} parent=27 // pred_region
          %v886 = vld [vmem:[#allocation2] sm:$0x3]
          %887 = vst [vmem:[%s221] sm:$0x3] %v886
        $region40: #{cnn_forward.3} parent=27 // pred_fallthru
          _
        %p888 = scmp.lt.s32.totalorder %s20, 1
        %s889 = scalar_select %p888, %s20, 1
        %s890 = smul.addr %s889, 2
        %s891 = scalar_lea.vmem %s2, %s890
        // Predicated region
        $region41: #{cnn_forward.3} parent=27 // pred_check
          %p892 = pneg %p106
        $region42: #{cnn_forward.3} parent=27 // pred_check_branch
          %894 = sbr.rel (%p892) target = $region44
        $region43: #{cnn_forward.3} parent=27 // pred_region
          _
        $region44: #{cnn_forward.3} parent=27 // pred_fallthru
          _
      $region28: #{cnn_forward.3} parent=5 // pred_fallthru
        _
      %p895 = scmp.le.s32.totalorder 2, %s11
      // Predicated region
      $region45: #{cnn_forward.3} parent=5 // pred_check
        %p896 = pneg %p895
      $region46: #{cnn_forward.3} parent=5 // pred_check_branch
        %898 = sbr.rel (%p896) target = $region48
      $region47: #{cnn_forward.3} parent=5 // pred_region
        %s899 = ssub.s32 %s11, 2
        // Predicated region
        $region49: #{cnn_forward.3} parent=47 // pred_check
          %p900 = pneg %p112
        $region50: #{cnn_forward.3} parent=47 // pred_check_branch
          %902 = sbr.rel (%p900) target = $region52
        $region51: #{cnn_forward.3} parent=47 // pred_region
          %p903 = scmp.lt.s32.totalorder %s22, 1
          %s904 = scalar_select %p903, %s22, 1
          %s905 = smul.addr %s904, 2
          %s906 = scalar_lea.vmem %s2, %s905
        $region52: #{cnn_forward.3} parent=47 // pred_fallthru
          _
      $region48: #{cnn_forward.3} parent=5 // pred_fallthru
        _
    $region6: #{cnn_forward.3} parent=1 // loop_footer
      %s15 = sadd.s32 1, %s11
    $region7: #{cnn_forward.3} parent=1 // loop_footer_branch
      %10 = sbr.rel target = $region3
    $region8: #{cnn_forward.3} parent=1 // loop_exit
      _
    %907 = vsyncpa [#allocation4], 1
    %s908 = scalar_lea.sflag [#allocation4], 1
    %909 = vsyncpa %s908, 1

</llo_original>
